<compile_context>
chip_gen: v7x
topology: tpu7x:2x2x1
jax: 0.10.0
libtpu: 0.0.40
codegen_flags: <defaults>
</compile_context>

<pallas_src>
import numpy as np
import jax
import jax.numpy as jnp
from jax.experimental import pallas as pl
from jax.experimental.pallas import tpu as pltpu


# ----------------------------------------------------------------------------
# Host-side index computation — mirrors the torch reference exactly.
# ----------------------------------------------------------------------------
def compute_shift_indices(inv=False, sx=1, sy=1, w=14, h=14, key=None):
    stride = 1
    multiplier = -1 if inv else 1
    hsy, wsx = h // sy, w // sx

    if sy * sx == 1:
        # randint(1, ...) is always 0 -> fully deterministic (default config).
        rand = np.zeros((hsy, wsx, 1), dtype=np.int64)
    else:
        # TODO(synk): torch.Generator RNG stream is not reproducible in JAX;
        # use a JAX PRNG draw for the general sx*sy > 1 case.
        if key is None:
            key = jax.random.PRNGKey(0)
        rand = np.asarray(
            jax.random.randint(key, (hsy, wsx, 1), 0, sy * sx)
        ).astype(np.int64)

    buf = np.zeros((hsy, wsx, sy * sx), dtype=np.int64)
    np.put_along_axis(buf, rand, -1, axis=2)           # scatter -1
    buf = buf.reshape(hsy, wsx, sy, sx).transpose(0, 2, 1, 3)  # == .transpose(1, 2)
    buf = buf.reshape(hsy * sy, wsx * sx)
    if hsy * sy < h or wsx * sx < w:
        full = np.zeros((h, w), dtype=np.int64)
        full[: hsy * sy, : wsx * sx] = buf
    else:
        full = buf

    # torch argsort tie-breaking modeled as stable (identity for default cfg).
    order = np.argsort(full.reshape(-1), kind="stable")
    num_dst = hsy * wsx
    shift_idx = order[:num_dst]

    # Per-destination time shift with the original loop's sticky `inv` quirk.
    inv_state = inv
    shifts = []
    for i in range(num_dst):
        w_idx = int(shift_idx[i]) % 7
        h_idx = int(shift_idx[i]) // 7
        wm, hm = w_idx % 3, h_idx % 3
        if wm == 0 and hm == 0:
            s = -4 * multiplier * stride
        elif wm == 0 and hm == 1:
            s = multiplier * stride
        elif wm == 0 and hm == 2:
            s = 2 * multiplier * stride
        elif wm == 1 and hm == 0:
            s = -multiplier * stride
        elif wm == 1 and hm == 1:
            if w_idx != h_idx:
                inv_state = -1
            s = int(inv_state) * multiplier * stride
        elif wm == 1 and hm == 2:
            s = 3 * multiplier * stride
        elif wm == 2 and hm == 0:
            s = -2 * multiplier * stride
        elif wm == 2 and hm == 1:
            s = -3 * multiplier * stride
        else:  # wm == 2 and hm == 2
            s = 4 * multiplier * stride
        shifts.append(s)

    return shift_idx.astype(np.int32), np.asarray(shifts, dtype=np.int64)


# ----------------------------------------------------------------------------
# Pallas kernel: one batch slab (1, T, N*C) per grid step; apply each distinct
# time-shift as a static roll along T and select lanes via a class map.
# ----------------------------------------------------------------------------
def _make_kernel(unique_shifts):
    unique_shifts = tuple(int(s) for s in unique_shifts)

    def kernel(cls_ref, feat_ref, out_ref):
        x = feat_ref[...]                                   # (1, T, NC)
        # Hoist the broadcast out of the class loop (JAX does not CSE it).
        cls_b = jnp.broadcast_to(cls_ref[...], x.shape)     # (1, T, NC) int32

        def rolled(s):
            return x if s == 0 else jnp.roll(x, s, axis=1)  # static shift

        acc = rolled(unique_shifts[0])
        for k in range(1, len(unique_shifts)):
            acc = jnp.where(cls_b == k, rolled(unique_shifts[k]), acc)
        out_ref[...] = acc

    return kernel


def rand2d_patch_shift(x, *, inv=False, sx=1, sy=1, w=14, h=14):
    B, T, H, W, C = x.shape
    assert H == h and W == w, "spatial dims must match module's (h, w)"
    hsy, wsx = h // sy, w // sx

    sidx, shifts = compute_shift_indices(inv=inv, sx=sx, sy=sy, w=w, h=h)
    num_dst = sidx.shape[0]
    N = H * W

    feat = x.reshape(B, T, N, C)
    if not np.array_equal(sidx, np.arange(N)):
        # Non-default config: one XLA gather outside the kernel.
        feat = jnp.take(feat, jnp.asarray(sidx), axis=2)
    NCd = num_dst * C
    feat = feat.reshape(B, T, NCd)          # lane-dense layout, pure reshape

    # Per-lane shift-class map: lanes [i*C, (i+1)*C) get the class of shift_i.
    eff = (shifts % T).astype(np.int64)
    uniq, inv_map = np.unique(eff, return_inverse=True)
    cls_lane = np.repeat(inv_map.astype(np.int32), C).reshape(1, 1, NCd)

    itemsize = jnp.dtype(x.dtype).itemsize
    block_bytes = T * NCd * itemsize
    cls_bytes = NCd * 4
    vmem_needed = 4 * block_bytes + 2 * cls_bytes + (1 << 20)
    vmem_limit = int(min(max(vmem_needed, 16 << 20), 64 << 20))

    cost = pl.CostEstimate(
        flops=2 * len(uniq) * B * T * NCd,
        transcendentals=0,
        bytes_accessed=2 * B * T * NCd * itemsize + cls_bytes,
    )

    out = pl.pallas_call(
        _make_kernel(uniq),
        out_shape=jax.ShapeDtypeStruct((B, T, NCd), x.dtype),
        grid=(B,),
        in_specs=[
            pl.BlockSpec((1, 1, NCd), lambda b: (0, 0, 0)),   # class map
            pl.BlockSpec((1, T, NCd), lambda b: (b, 0, 0)),   # feat slab
        ],
        out_specs=pl.BlockSpec((1, T, NCd), lambda b: (b, 0, 0)),
        compiler_params=pltpu.CompilerParams(
            dimension_semantics=("parallel",),
            vmem_limit_bytes=vmem_limit,
        ),
        cost_estimate=cost,
    )(jnp.asarray(cls_lane), feat)

    return out.reshape(B, T, hsy, wsx, C)


# ----------------------------------------------------------------------------
# Pure-numpy reference (same semantics as the torch module) for sanity check.
# ----------------------------------------------------------------------------
def _reference_numpy(x, inv=False, sx=1, sy=1, w=14, h=14):
    B, T, H, W, C = x.shape
    feat = x.reshape(B, T, H * W, C)
    sidx, shifts = compute_shift_indices(inv=inv, sx=sx, sy=sy, w=w, h=h)
    out = []
    for i in range(sidx.shape[0]):
        out.append(np.roll(feat[:, :, sidx[i], :], shift=int(shifts[i]), axis=1))
    out = np.stack(out, axis=2)
    hsy, wsx = h // sy, w // sx
    return out.reshape(B, T, hsy, wsx, C)


if __name__ == "__main__":
    # Small shapes consistent with the module defaults (h = w = 14, since the
    # %7 / //7 rules assume this grid), small B, T, C.
    B, T, H, W, C = 2, 8, 14, 14, 32
    key = jax.random.PRNGKey(0)
    x = jax.random.normal(key, (B, T, H, W, C), dtype=jnp.float32)

    y = rand2d_patch_shift(x, inv=False, sx=1, sy=1, w=W, h=H)
    y = jax.block_until_ready(y)

    ref = _reference_numpy(np.asarray(x), inv=False, sx=1, sy=1, w=W, h=H)
    np.testing.assert_allclose(np.asarray(y), ref, rtol=0, atol=0)

    print("KERNEL_OK")
</pallas_src>

<mosaic_0001>
module attributes {stable_mosaic.version = 11 : i64} {
  func.func @kernel(%arg0: i32, %arg1: memref<1x1x6272xi32, #tpu.memory_space<vmem>>, %arg2: memref<1x8x6272xf32, #tpu.memory_space<vmem>>, %arg3: memref<1x8x6272xf32, #tpu.memory_space<vmem>>) attributes {dimension_semantics = [#tpu.dimension_semantics<parallel>], iteration_bounds = array<i64: 2>, scalar_prefetch = 0 : i64, scratch_operands = 0 : i64, tpu.core_type = #tpu.core_type<tc>, window_params = [{pipeline_mode = #tpu.pipeline_mode<synchronous>, transform_indices = @transform_0, window_bounds = array<i64: 1, 1, 6272>}, {transform_indices = @transform_1, window_bounds = array<i64: 1, 8, 6272>}, {transform_indices = @transform_2, window_bounds = array<i64: 1, 8, 6272>}]} {
    %c0 = arith.constant 0 : index
    %c0_0 = arith.constant 0 : index
    %c0_1 = arith.constant 0 : index
    %0 = vector.load %arg2[%c0, %c0_0, %c0_1] : memref<1x8x6272xf32, #tpu.memory_space<vmem>>, vector<1x8x6272xf32>
    %c0_2 = arith.constant 0 : index
    %c0_3 = arith.constant 0 : index
    %c0_4 = arith.constant 0 : index
    %1 = vector.load %arg1[%c0_2, %c0_3, %c0_4] : memref<1x1x6272xi32, #tpu.memory_space<vmem>>, vector<1x1x6272xi32>
    %2 = vector.shape_cast %1 : vector<1x1x6272xi32> to vector<1x1x6272xi32>
    %3 = vector.broadcast %2 : vector<1x1x6272xi32> to vector<1x8x6272xi32>
    %c1_i32 = arith.constant 1 : i32
    %4 = vector.broadcast %c1_i32 : i32 to vector<1x8x6272xi32>
    %5 = arith.cmpi eq, %3, %4 : vector<1x8x6272xi32>
    %6 = vector.extract_strided_slice %0 {offsets = [0, 7, 0], sizes = [1, 1, 6272], strides = [1, 1, 1]} : vector<1x8x6272xf32> to vector<1x1x6272xf32>
    %7 = vector.extract_strided_slice %0 {offsets = [0, 0, 0], sizes = [1, 7, 6272], strides = [1, 1, 1]} : vector<1x8x6272xf32> to vector<1x7x6272xf32>
    %8 = tpu.concatenate %6, %7 in 1 : vector<1x1x6272xf32>, vector<1x7x6272xf32> -> vector<1x8x6272xf32>
    %9 = arith.select %5, %8, %0 : vector<1x8x6272xi1>, vector<1x8x6272xf32>
    %c2_i32 = arith.constant 2 : i32
    %10 = vector.broadcast %c2_i32 : i32 to vector<1x8x6272xi32>
    %11 = arith.cmpi eq, %3, %10 : vector<1x8x6272xi32>
    %12 = vector.extract_strided_slice %0 {offsets = [0, 6, 0], sizes = [1, 2, 6272], strides = [1, 1, 1]} : vector<1x8x6272xf32> to vector<1x2x6272xf32>
    %13 = vector.extract_strided_slice %0 {offsets = [0, 0, 0], sizes = [1, 6, 6272], strides = [1, 1, 1]} : vector<1x8x6272xf32> to vector<1x6x6272xf32>
    %14 = tpu.concatenate %12, %13 in 1 : vector<1x2x6272xf32>, vector<1x6x6272xf32> -> vector<1x8x6272xf32>
    %15 = arith.select %11, %14, %9 : vector<1x8x6272xi1>, vector<1x8x6272xf32>
    %c3_i32 = arith.constant 3 : i32
    %16 = vector.broadcast %c3_i32 : i32 to vector<1x8x6272xi32>
    %17 = arith.cmpi eq, %3, %16 : vector<1x8x6272xi32>
    %18 = vector.extract_strided_slice %0 {offsets = [0, 5, 0], sizes = [1, 3, 6272], strides = [1, 1, 1]} : vector<1x8x6272xf32> to vector<1x3x6272xf32>
    %19 = vector.extract_strided_slice %0 {offsets = [0, 0, 0], sizes = [1, 5, 6272], strides = [1, 1, 1]} : vector<1x8x6272xf32> to vector<1x5x6272xf32>
    %20 = tpu.concatenate %18, %19 in 1 : vector<1x3x6272xf32>, vector<1x5x6272xf32> -> vector<1x8x6272xf32>
    %21 = arith.select %17, %20, %15 : vector<1x8x6272xi1>, vector<1x8x6272xf32>
    %c4_i32 = arith.constant 4 : i32
    %22 = vector.broadcast %c4_i32 : i32 to vector<1x8x6272xi32>
    %23 = arith.cmpi eq, %3, %22 : vector<1x8x6272xi32>
    %24 = vector.extract_strided_slice %0 {offsets = [0, 4, 0], sizes = [1, 4, 6272], strides = [1, 1, 1]} : vector<1x8x6272xf32> to vector<1x4x6272xf32>
    %25 = vector.extract_strided_slice %0 {offsets = [0, 0, 0], sizes = [1, 4, 6272], strides = [1, 1, 1]} : vector<1x8x6272xf32> to vector<1x4x6272xf32>
    %26 = tpu.concatenate %24, %25 in 1 : vector<1x4x6272xf32>, vector<1x4x6272xf32> -> vector<1x8x6272xf32>
    %27 = arith.select %23, %26, %21 : vector<1x8x6272xi1>, vector<1x8x6272xf32>
    %c5_i32 = arith.constant 5 : i32
    %28 = vector.broadcast %c5_i32 : i32 to vector<1x8x6272xi32>
    %29 = arith.cmpi eq, %3, %28 : vector<1x8x6272xi32>
    %30 = vector.extract_strided_slice %0 {offsets = [0, 3, 0], sizes = [1, 5, 6272], strides = [1, 1, 1]} : vector<1x8x6272xf32> to vector<1x5x6272xf32>
    %31 = vector.extract_strided_slice %0 {offsets = [0, 0, 0], sizes = [1, 3, 6272], strides = [1, 1, 1]} : vector<1x8x6272xf32> to vector<1x3x6272xf32>
    %32 = tpu.concatenate %30, %31 in 1 : vector<1x5x6272xf32>, vector<1x3x6272xf32> -> vector<1x8x6272xf32>
    %33 = arith.select %29, %32, %27 : vector<1x8x6272xi1>, vector<1x8x6272xf32>
    %c6_i32 = arith.constant 6 : i32
    %34 = vector.broadcast %c6_i32 : i32 to vector<1x8x6272xi32>
    %35 = arith.cmpi eq, %3, %34 : vector<1x8x6272xi32>
    %36 = vector.extract_strided_slice %0 {offsets = [0, 2, 0], sizes = [1, 6, 6272], strides = [1, 1, 1]} : vector<1x8x6272xf32> to vector<1x6x6272xf32>
    %37 = vector.extract_strided_slice %0 {offsets = [0, 0, 0], sizes = [1, 2, 6272], strides = [1, 1, 1]} : vector<1x8x6272xf32> to vector<1x2x6272xf32>
    %38 = tpu.concatenate %36, %37 in 1 : vector<1x6x6272xf32>, vector<1x2x6272xf32> -> vector<1x8x6272xf32>
    %39 = arith.select %35, %38, %33 : vector<1x8x6272xi1>, vector<1x8x6272xf32>
    %c7_i32 = arith.constant 7 : i32
    %40 = vector.broadcast %c7_i32 : i32 to vector<1x8x6272xi32>
    %41 = arith.cmpi eq, %3, %40 : vector<1x8x6272xi32>
    %42 = vector.extract_strided_slice %0 {offsets = [0, 1, 0], sizes = [1, 7, 6272], strides = [1, 1, 1]} : vector<1x8x6272xf32> to vector<1x7x6272xf32>
    %43 = vector.extract_strided_slice %0 {offsets = [0, 0, 0], sizes = [1, 1, 6272], strides = [1, 1, 1]} : vector<1x8x6272xf32> to vector<1x1x6272xf32>
    %44 = tpu.concatenate %42, %43 in 1 : vector<1x7x6272xf32>, vector<1x1x6272xf32> -> vector<1x8x6272xf32>
    %45 = arith.select %41, %44, %39 : vector<1x8x6272xi1>, vector<1x8x6272xf32>
    %c0_5 = arith.constant 0 : index
    %c0_6 = arith.constant 0 : index
    %c0_7 = arith.constant 0 : index
    %46 = vector.load %arg3[%c0_5, %c0_6, %c0_7] : memref<1x8x6272xf32, #tpu.memory_space<vmem>>, vector<1x8x6272xf32>
    tpu.vector_store %arg3[%c0_5, %c0_6, %c0_7], %45 {strides = array<i32>} : memref<1x8x6272xf32, #tpu.memory_space<vmem>>, vector<1x8x6272xf32>,
    return
  }
  func.func @transform_0(%arg0: i32) -> (i32, i32, i32) {
    %c0_i32 = arith.constant 0 : i32
    %c0_i32_0 = arith.constant 0 : i32
    %c0_i32_1 = arith.constant 0 : i32
    %c0_i32_2 = arith.constant 0 : i32
    return %c0_i32, %c0_i32_0, %c0_i32_1 : i32, i32, i32
  }
  func.func @transform_1(%arg0: i32) -> (i32, i32, i32) {
    %c0_i32 = arith.constant 0 : i32
    %c0_i32_0 = arith.constant 0 : i32
    %c0_i32_1 = arith.constant 0 : i32
    return %arg0, %c0_i32, %c0_i32_0 : i32, i32, i32
  }
  func.func @transform_2(%arg0: i32) -> (i32, i32, i32) {
    %c0_i32 = arith.constant 0 : i32
    %c0_i32_0 = arith.constant 0 : i32
    %c0_i32_1 = arith.constant 0 : i32
    return %arg0, %c0_i32, %c0_i32_0 : i32, i32, i32
  }
}

</mosaic_0001>

<llo_original>
// kernel: tpu_custom_call.1
$region0: #{tpu_custom_call.1}
  #allocation0 [shape = 'u32[]', space=smem, size = 0x4, offset = 0x4, fixed_abs, tag = 'smem constant byte address 0x4 - core index']
  #allocation1 [shape = 'u32[144,128]{1,0:T(1,128)}', space=vmem, size = 0x12000, scoped, tag = 'internal scratch']
  %s0 = inlined_call_operand.hbm [shape: s32[1,1,6272], index: 0, kind: input, shape index: {}]
  %s1 = inlined_call_operand.hbm [shape: f32[2,8,6272], index: 1, kind: input, shape index: {}]
  %s2 = inlined_call_operand.hbm [shape: f32[2,8,6272], index: 2, kind: output, shape index: {}]
  %s3 = sld [smem:[#allocation0]]
  $region49: #{tpu_custom_call.1} parent=0
    _
  %s5 = ssub.s32 1, %s3
  %s6 = scalar_select 0, %s5, %s3
  $region1: #{tpu_custom_call.1} parent=0
    #allocation2 [shape = 'u8[25088]{0}', space=vmem, size = 0x6400, scoped, tag = 'input window, operand 0, single buffered']
    #allocation3 [shape = 's32[2]{0}', space=sflag, size = 0x8, scoped, tag = 'scoped memory for tpu_custom_call.1']
    #allocation4 [shape = 's32[2]{0}', space=sflag, size = 0x8, scoped, tag = 'scoped memory for tpu_custom_call.1']
    #allocation5 [shape = 'u8[401408]{0}', space=vmem, size = 0x62000, scoped, tag = 'input window, operand 1']
    #allocation6 [shape = 's32[2]{0}', space=sflag, size = 0x8, scoped, tag = 'scoped memory for tpu_custom_call.1']
    #allocation7 [shape = 'u8[401408]{0}', space=vmem, size = 0x62000, scoped, tag = 'output window, operand 0']
    %7 = vsyncpa [#allocation3], 0
    %8 = vsyncpa [#allocation6], 0
    %s9 = scalar_lea.sflag [#allocation6], 1
    %10 = vsyncpa %s9, 0
    %11 = vsyncpa [#allocation4], 0
    %s12 = scalar_lea.sflag [#allocation4], 1
    %13 = vsyncpa %s12, 0
    loop: start=0, step=1, limit=4
    $region2: #{tpu_custom_call.1} parent=1 // loop_pre_header
      _
    $region3: #{tpu_custom_call.1} parent=1 // loop_header
      %s15 = sphi 0, %s19
      %p16 = scmp.ge.s32.totalorder %s15, 4
      %s23 = sphi 0, %s23
      %s25 = sphi 0, %s23
      %s26 = sphi 0, %s25
      %s40 = sphi 0, %s26
      %s46 = sphi 0, %s48
      %s49 = sphi 0, %s46
      %s50 = sphi 0, %s49
      %s66 = sphi 0, %s50
      %s72 = sphi 0, %s74
      %s75 = sphi 0, %s72
      %s76 = sphi 0, %s75
      %s92 = sphi 0, %s76
    $region4: #{tpu_custom_call.1} parent=1 // loop_header_branch
      %18 = sbr.rel (%p16) target = $region8
    $region5: #{tpu_custom_call.1} parent=1 // loop_body
      %s20 = ssub.s32 %s15, 1
      %s21 = ssub.s32 %s15, 2
      %s22 = sadd.s32 %s15, 1
      %s24 = sadd.s32 %s23, 1
      %p27 = scmp.eq.s32.totalorder %s15, 1
      %p28 = scmp.ne.s32.totalorder %s23, %s25
      %p29 = scmp.eq.s32.totalorder %s15, 0
      %p30 = por %p28, %p29
      %p31 = scmp.ne.s32.totalorder %s23, %s25
      %p32 = scmp.eq.s32.totalorder %s20, 1
      %p33 = por %p31, %p32
      %p34 = scmp.ne.s32.totalorder %s25, %s26
      %p35 = scmp.eq.s32.totalorder %s20, 0
      %p36 = por %p34, %p35
      %p37 = scmp.ne.s32.totalorder %s25, %s26
      %p38 = scmp.eq.s32.totalorder %s21, 1
      %p39 = por %p37, %p38
      %p41 = scmp.ne.s32.totalorder %s26, %s40
      %p42 = scmp.eq.s32.totalorder %s21, 0
      %p43 = por %p41, %p42
      %s44 = ssub.s32 %s15, %s22
      %p45 = scmp.eq.s32.totalorder %s44, 0
      %s47 = sadd.s32 %s46, 1
      %s48 = scalar_select %p45, %s46, %s47
      %p51 = pneg %p45
      %p52 = scmp.eq.s32.totalorder %s15, 1
      %p53 = por %p51, %p52
      %p54 = scmp.ne.s32.totalorder %s46, %s49
      %p55 = scmp.eq.s32.totalorder %s15, 0
      %p56 = por %p54, %p55
      %p57 = scmp.ne.s32.totalorder %s46, %s49
      %p58 = scmp.eq.s32.totalorder %s20, 1
      %p59 = por %p57, %p58
      %p60 = scmp.ne.s32.totalorder %s49, %s50
      %p61 = scmp.eq.s32.totalorder %s20, 0
      %p62 = por %p60, %p61
      %p63 = scmp.ne.s32.totalorder %s49, %s50
      %p64 = scmp.eq.s32.totalorder %s21, 1
      %p65 = por %p63, %p64
      %p67 = scmp.ne.s32.totalorder %s50, %s66
      %p68 = scmp.eq.s32.totalorder %s21, 0
      %p69 = por %p67, %p68
      %s70 = ssub.s32 %s15, %s22
      %p71 = scmp.eq.s32.totalorder %s70, 0
      %s73 = sadd.s32 %s72, 1
      %s74 = scalar_select %p71, %s72, %s73
      %p77 = pneg %p71
      %p78 = scmp.eq.s32.totalorder %s15, 1
      %p79 = por %p77, %p78
      %p80 = scmp.ne.s32.totalorder %s72, %s75
      %p81 = scmp.eq.s32.totalorder %s15, 0
      %p82 = por %p80, %p81
      %p83 = scmp.ne.s32.totalorder %s72, %s75
      %p84 = scmp.eq.s32.totalorder %s20, 1
      %p85 = por %p83, %p84
      %p86 = scmp.ne.s32.totalorder %s75, %s76
      %p87 = scmp.eq.s32.totalorder %s20, 0
      %p88 = por %p86, %p87
      %p89 = scmp.ne.s32.totalorder %s75, %s76
      %p90 = scmp.eq.s32.totalorder %s21, 1
      %p91 = por %p89, %p90
      %p93 = scmp.ne.s32.totalorder %s76, %s92
      %p94 = scmp.eq.s32.totalorder %s21, 0
      %p95 = por %p93, %p94
      %p96 = scmp.le.s32.totalorder 1, %s15
      %p97 = scmp.lt.s32.totalorder %s15, 3
      %p98 = pnand %p96, %p97
      %p99 = pneg %p98
      // Predicated region
      $region9: #{tpu_custom_call.1} parent=5 // pred_check
        _
      $region10: #{tpu_custom_call.1} parent=5 // pred_check_branch
        %101 = sbr.rel (%p98) target = $region12
      $region11: #{tpu_custom_call.1} parent=5 // pred_region
        %s102 = ssub.s32 %s15, 1
        // Predicated region
        $region13: #{tpu_custom_call.1} parent=11 // pred_check
          %p103 = pneg %p36
        $region14: #{tpu_custom_call.1} parent=11 // pred_check_branch
          %105 = sbr.rel (%p103) target = $region16
        $region15: #{tpu_custom_call.1} parent=11 // pred_region
          %s107 = ssub.s32 784, 784
          %108 = vsyncadd [#allocation3], %s107
          %s110 = sshll.u32 [#allocation2], 4
          %s111 = int_to_ptr.vmem [resolvable:$true] %s110
          %113 = dma.hbm_to_vmem [thread:$0]  %s0, 784, %s111, [#allocation3]
        $region16: #{tpu_custom_call.1} parent=11 // pred_fallthru
          _
      $region12: #{tpu_custom_call.1} parent=5 // pred_fallthru
        _
      %p114 = scmp.lt.s32.totalorder %s15, 2
      // Predicated region
      $region17: #{tpu_custom_call.1} parent=5 // pred_check
        %p115 = pneg %p114
      $region18: #{tpu_custom_call.1} parent=5 // pred_check_branch
        %117 = sbr.rel (%p115) target = $region20
      $region19: #{tpu_custom_call.1} parent=5 // pred_region
        // Predicated region
        $region21: #{tpu_custom_call.1} parent=19 // pred_check
          %p118 = pneg %p56
        $region22: #{tpu_custom_call.1} parent=19 // pred_check_branch
          %120 = sbr.rel (%p118) target = $region24
        $region23: #{tpu_custom_call.1} parent=19 // pred_region
          %s121 = sand.u32 %s46, 1
          %s122 = scalar_lea.sflag [#allocation6], %s121
          %s123 = sand.u32 %s46, 1
          %s124 = smul.addr %s123, 392
          %s125 = scalar_lea.vmem [#allocation5], %s124
          %s127 = ssub.s32 6272, 6272
          %128 = vsyncadd %s122, %s127
          %s129 = smul.addr %s15, 49
          %s130 = smul.addr %s129, 128
          %s131 = scalar_lea.hbm %s1, %s130
          %s133 = sshll.u32 %s125, 4
          %s134 = int_to_ptr.vmem [resolvable:$true] %s133
          %136 = dma.hbm_to_vmem [thread:$0]  %s131, 6272, %s134, %s122
        $region24: #{tpu_custom_call.1} parent=19 // pred_fallthru
          _
      $region20: #{tpu_custom_call.1} parent=5 // pred_fallthru
        _
      %p137 = scmp.le.s32.totalorder 1, %s15
      %p138 = scmp.lt.s32.totalorder %s15, 3
      %p139 = pnand %p137, %p138
      %p140 = pneg %p139
      // Predicated region
      $region25: #{tpu_custom_call.1} parent=5 // pred_check
        _
      $region26: #{tpu_custom_call.1} parent=5 // pred_check_branch
        %142 = sbr.rel (%p139) target = $region28
      $region27: #{tpu_custom_call.1} parent=5 // pred_region
        %s143 = ssub.s32 %s15, 1
        // Predicated region
        $region29: #{tpu_custom_call.1} parent=27 // pred_check
          %p144 = pneg %p36
        $region30: #{tpu_custom_call.1} parent=27 // pred_check_branch
          %146 = sbr.rel (%p144) target = $region32
        $region31: #{tpu_custom_call.1} parent=27 // pred_region
          %147 = dma.done [#allocation3], 784
        $region32: #{tpu_custom_call.1} parent=27 // pred_fallthru
          _
        %s148 = sand.u32 %s49, 1
        %s149 = scalar_lea.sflag [#allocation6], %s148
        %s150 = sand.u32 %s49, 1
        %s151 = smul.addr %s150, 392
        %s152 = scalar_lea.vmem [#allocation5], %s151
        // Predicated region
        $region33: #{tpu_custom_call.1} parent=27 // pred_check
          %p153 = pneg %p62
        $region34: #{tpu_custom_call.1} parent=27 // pred_check_branch
          %155 = sbr.rel (%p153) target = $region36
        $region35: #{tpu_custom_call.1} parent=27 // pred_region
          %156 = dma.done %s149, 6272
        $region36: #{tpu_custom_call.1} parent=27 // pred_fallthru
          _
        %p157 = pneg %p36
        %p158 = pneg %p33
        %s159 = sand.u32 %s49, 1
        %s160 = scalar_lea.sflag [#allocation6], %s159
        %s161 = sand.u32 %s49, 1
        %s162 = smul.addr %s161, 392
        %s163 = scalar_lea.vmem [#allocation5], %s162
        %p164 = pneg %p62
        %p165 = pneg %p59
        %p166 = pneg %p88
        %p167 = pneg %p85
        %s168 = sand.u32 %s75, 1
        %s169 = scalar_lea.sflag [#allocation4], %s168
        %s170 = sand.u32 %s75, 1
        %s171 = smul.addr %s170, 392
        %s172 = scalar_lea.vmem [#allocation7], %s171
        %v173 = vld [vmem:[%s152] sm:$0xff]
        %v174 = vld [vmem:[%s152 + $0x8] sm:$0xff]
        %v175 = vld [vmem:[%s152 + $0x10] sm:$0xff]
        %v176 = vld [vmem:[%s152 + $0x18] sm:$0xff]
        %v177 = vld [vmem:[%s152 + $0x20] sm:$0xff]
        %v178 = vld [vmem:[%s152 + $0x28] sm:$0xff]
        %v179 = vld [vmem:[%s152 + $0x30] sm:$0xff]
        %v180 = vld [vmem:[%s152 + $0x38] sm:$0xff]
        %v181 = vld [vmem:[%s152 + $0x40] sm:$0xff]
        %v182 = vld [vmem:[%s152 + $0x48] sm:$0xff]
        %v183 = vld [vmem:[%s152 + $0x50] sm:$0xff]
        %v184 = vld [vmem:[%s152 + $0x58] sm:$0xff]
        %v185 = vld [vmem:[%s152 + $0x60] sm:$0xff]
        %v186 = vld [vmem:[%s152 + $0x68] sm:$0xff]
        %v187 = vld [vmem:[%s152 + $0x70] sm:$0xff]
        %v188 = vld [vmem:[%s152 + $0x78] sm:$0xff]
        %v189 = vld [vmem:[%s152 + $0x80] sm:$0xff]
        %v190 = vld [vmem:[%s152 + $0x88] sm:$0xff]
        %v191 = vld [vmem:[%s152 + $0x90] sm:$0xff]
        %v192 = vld [vmem:[%s152 + $0x98] sm:$0xff]
        %v193 = vld [vmem:[%s152 + $0xa0] sm:$0xff]
        %v194 = vld [vmem:[%s152 + $0xa8] sm:$0xff]
        %v195 = vld [vmem:[%s152 + $0xb0] sm:$0xff]
        %v196 = vld [vmem:[%s152 + $0xb8] sm:$0xff]
        %v197 = vld [vmem:[%s152 + $0xc0] sm:$0xff]
        %v198 = vld [vmem:[%s152 + $0xc8] sm:$0xff]
        %v199 = vld [vmem:[%s152 + $0xd0] sm:$0xff]
        %v200 = vld [vmem:[%s152 + $0xd8] sm:$0xff]
        %v201 = vld [vmem:[%s152 + $0xe0] sm:$0xff]
        %v202 = vld [vmem:[%s152 + $0xe8] sm:$0xff]
        %v203 = vld [vmem:[%s152 + $0xf0] sm:$0xff]
        %v204 = vld [vmem:[%s152 + $0xf8] sm:$0xff]
        %v205 = vld [vmem:[%s152 + $0x100] sm:$0xff]
        %v206 = vld [vmem:[%s152 + $0x108] sm:$0xff]
        %v207 = vld [vmem:[%s152 + $0x110] sm:$0xff]
        %v208 = vld [vmem:[%s152 + $0x118] sm:$0xff]
        %v209 = vld [vmem:[%s152 + $0x120] sm:$0xff]
        %v210 = vld [vmem:[%s152 + $0x128] sm:$0xff]
        %v211 = vld [vmem:[%s152 + $0x130] sm:$0xff]
        %v212 = vld [vmem:[%s152 + $0x138] sm:$0xff]
        %v213 = vld [vmem:[%s152 + $0x140] sm:$0xff]
        %v214 = vld [vmem:[%s152 + $0x148] sm:$0xff]
        %v215 = vld [vmem:[%s152 + $0x150] sm:$0xff]
        %v216 = vld [vmem:[%s152 + $0x158] sm:$0xff]
        %v217 = vld [vmem:[%s152 + $0x160] sm:$0xff]
        %v218 = vld [vmem:[%s152 + $0x168] sm:$0xff]
        %v219 = vld [vmem:[%s152 + $0x170] sm:$0xff]
        %v220 = vld [vmem:[%s152 + $0x178] sm:$0xff]
        %v221 = vld [vmem:[%s152 + $0x180] sm:$0xff]
        %v222 = vld [vmem:[#allocation2] sm:$0xff]
        %v223 = vld [vmem:[#allocation2 + $0x8] sm:$0xff]
        %v224 = vld [vmem:[#allocation2 + $0x10] sm:$0xff]
        %v225 = vld [vmem:[#allocation2 + $0x18] sm:$0xff]
        %v226 = vld [vmem:[#allocation2 + $0x20] sm:$0xff]
        %v227 = vld [vmem:[#allocation2 + $0x28] sm:$0xff]
        %v228 = vld [vmem:[#allocation2 + $0x30] sm:$0x1]
        %v229 = vlaneseq
        %v230 = vshrl.u32 %v229, 7
        %v231 = vsub.s32 0, %v230
        %v232 = vrot.slane %v222, %v231
        %v233 = vlaneseq
        %v234 = vshrl.u32 %v233, 7
        %v235 = vsub.s32 1, %v234
        %v236 = vrot.slane %v222, %v235
        %v237 = vlaneseq
        %v238 = vshrl.u32 %v237, 7
        %v239 = vsub.s32 2, %v238
        %v240 = vrot.slane %v222, %v239
        %v241 = vlaneseq
        %v242 = vshrl.u32 %v241, 7
        %v243 = vsub.s32 3, %v242
        %v244 = vrot.slane %v222, %v243
        %v245 = vlaneseq
        %v246 = vshrl.u32 %v245, 7
        %v247 = vsub.s32 4, %v246
        %v248 = vrot.slane %v222, %v247
        %v249 = vlaneseq
        %v250 = vshrl.u32 %v249, 7
        %v251 = vsub.s32 5, %v250
        %v252 = vrot.slane %v222, %v251
        %v253 = vlaneseq
        %v254 = vshrl.u32 %v253, 7
        %v255 = vsub.s32 6, %v254
        %v256 = vrot.slane %v222, %v255
        %v257 = vlaneseq
        %v258 = vshrl.u32 %v257, 7
        %v259 = vsub.s32 7, %v258
        %v260 = vrot.slane %v222, %v259
        %v261 = vlaneseq
        %v262 = vshrl.u32 %v261, 7
        %v263 = vsub.s32 0, %v262
        %v264 = vrot.slane %v223, %v263
        %v265 = vlaneseq
        %v266 = vshrl.u32 %v265, 7
        %v267 = vsub.s32 1, %v266
        %v268 = vrot.slane %v223, %v267
        %v269 = vlaneseq
        %v270 = vshrl.u32 %v269, 7
        %v271 = vsub.s32 2, %v270
        %v272 = vrot.slane %v223, %v271
        %v273 = vlaneseq
        %v274 = vshrl.u32 %v273, 7
        %v275 = vsub.s32 3, %v274
        %v276 = vrot.slane %v223, %v275
        %v277 = vlaneseq
        %v278 = vshrl.u32 %v277, 7
        %v279 = vsub.s32 4, %v278
        %v280 = vrot.slane %v223, %v279
        %v281 = vlaneseq
        %v282 = vshrl.u32 %v281, 7
        %v283 = vsub.s32 5, %v282
        %v284 = vrot.slane %v223, %v283
        %v285 = vlaneseq
        %v286 = vshrl.u32 %v285, 7
        %v287 = vsub.s32 6, %v286
        %v288 = vrot.slane %v223, %v287
        %v289 = vlaneseq
        %v290 = vshrl.u32 %v289, 7
        %v291 = vsub.s32 7, %v290
        %v292 = vrot.slane %v223, %v291
        %v293 = vlaneseq
        %v294 = vshrl.u32 %v293, 7
        %v295 = vsub.s32 0, %v294
        %v296 = vrot.slane %v224, %v295
        %v297 = vlaneseq
        %v298 = vshrl.u32 %v297, 7
        %v299 = vsub.s32 1, %v298
        %v300 = vrot.slane %v224, %v299
        %v301 = vlaneseq
        %v302 = vshrl.u32 %v301, 7
        %v303 = vsub.s32 2, %v302
        %v304 = vrot.slane %v224, %v303
        %v305 = vlaneseq
        %v306 = vshrl.u32 %v305, 7
        %v307 = vsub.s32 3, %v306
        %v308 = vrot.slane %v224, %v307
        %v309 = vlaneseq
        %v310 = vshrl.u32 %v309, 7
        %v311 = vsub.s32 4, %v310
        %v312 = vrot.slane %v224, %v311
        %v313 = vlaneseq
        %v314 = vshrl.u32 %v313, 7
        %v315 = vsub.s32 5, %v314
        %v316 = vrot.slane %v224, %v315
        %v317 = vlaneseq
        %v318 = vshrl.u32 %v317, 7
        %v319 = vsub.s32 6, %v318
        %v320 = vrot.slane %v224, %v319
        %v321 = vlaneseq
        %v322 = vshrl.u32 %v321, 7
        %v323 = vsub.s32 7, %v322
        %v324 = vrot.slane %v224, %v323
        %v325 = vlaneseq
        %v326 = vshrl.u32 %v325, 7
        %v327 = vsub.s32 0, %v326
        %v328 = vrot.slane %v225, %v327
        %v329 = vlaneseq
        %v330 = vshrl.u32 %v329, 7
        %v331 = vsub.s32 1, %v330
        %v332 = vrot.slane %v225, %v331
        %v333 = vlaneseq
        %v334 = vshrl.u32 %v333, 7
        %v335 = vsub.s32 2, %v334
        %v336 = vrot.slane %v225, %v335
        %v337 = vlaneseq
        %v338 = vshrl.u32 %v337, 7
        %v339 = vsub.s32 3, %v338
        %v340 = vrot.slane %v225, %v339
        %v341 = vlaneseq
        %v342 = vshrl.u32 %v341, 7
        %v343 = vsub.s32 4, %v342
        %v344 = vrot.slane %v225, %v343
        %v345 = vlaneseq
        %v346 = vshrl.u32 %v345, 7
        %v347 = vsub.s32 5, %v346
        %v348 = vrot.slane %v225, %v347
        %v349 = vlaneseq
        %v350 = vshrl.u32 %v349, 7
        %v351 = vsub.s32 6, %v350
        %v352 = vrot.slane %v225, %v351
        %v353 = vlaneseq
        %v354 = vshrl.u32 %v353, 7
        %v355 = vsub.s32 7, %v354
        %v356 = vrot.slane %v225, %v355
        %v357 = vlaneseq
        %v358 = vshrl.u32 %v357, 7
        %v359 = vsub.s32 0, %v358
        %v360 = vrot.slane %v226, %v359
        %v361 = vlaneseq
        %v362 = vshrl.u32 %v361, 7
        %v363 = vsub.s32 1, %v362
        %v364 = vrot.slane %v226, %v363
        %v365 = vlaneseq
        %v366 = vshrl.u32 %v365, 7
        %v367 = vsub.s32 2, %v366
        %v368 = vrot.slane %v226, %v367
        %v369 = vlaneseq
        %v370 = vshrl.u32 %v369, 7
        %v371 = vsub.s32 3, %v370
        %v372 = vrot.slane %v226, %v371
        %v373 = vlaneseq
        %v374 = vshrl.u32 %v373, 7
        %v375 = vsub.s32 4, %v374
        %v376 = vrot.slane %v226, %v375
        %v377 = vlaneseq
        %v378 = vshrl.u32 %v377, 7
        %v379 = vsub.s32 5, %v378
        %v380 = vrot.slane %v226, %v379
        %v381 = vlaneseq
        %v382 = vshrl.u32 %v381, 7
        %v383 = vsub.s32 6, %v382
        %v384 = vrot.slane %v226, %v383
        %v385 = vlaneseq
        %v386 = vshrl.u32 %v385, 7
        %v387 = vsub.s32 7, %v386
        %v388 = vrot.slane %v226, %v387
        %v389 = vlaneseq
        %v390 = vshrl.u32 %v389, 7
        %v391 = vsub.s32 0, %v390
        %v392 = vrot.slane %v227, %v391
        %v393 = vlaneseq
        %v394 = vshrl.u32 %v393, 7
        %v395 = vsub.s32 1, %v394
        %v396 = vrot.slane %v227, %v395
        %v397 = vlaneseq
        %v398 = vshrl.u32 %v397, 7
        %v399 = vsub.s32 2, %v398
        %v400 = vrot.slane %v227, %v399
        %v401 = vlaneseq
        %v402 = vshrl.u32 %v401, 7
        %v403 = vsub.s32 3, %v402
        %v404 = vrot.slane %v227, %v403
        %v405 = vlaneseq
        %v406 = vshrl.u32 %v405, 7
        %v407 = vsub.s32 4, %v406
        %v408 = vrot.slane %v227, %v407
        %v409 = vlaneseq
        %v410 = vshrl.u32 %v409, 7
        %v411 = vsub.s32 5, %v410
        %v412 = vrot.slane %v227, %v411
        %v413 = vlaneseq
        %v414 = vshrl.u32 %v413, 7
        %v415 = vsub.s32 6, %v414
        %v416 = vrot.slane %v227, %v415
        %v417 = vlaneseq
        %v418 = vshrl.u32 %v417, 7
        %v419 = vsub.s32 7, %v418
        %v420 = vrot.slane %v227, %v419
        %v421 = vlaneseq
        %v422 = vshrl.u32 %v421, 7
        %v423 = vsub.s32 0, %v422
        %v424 = vrot.slane %v228, %v423
        %vm425 = vcmp.eq.s32.totalorder %v232, 1
        %vm426 = vcmp.eq.s32.totalorder %v236, 1
        %vm427 = vcmp.eq.s32.totalorder %v240, 1
        %vm428 = vcmp.eq.s32.totalorder %v244, 1
        %vm429 = vcmp.eq.s32.totalorder %v248, 1
        %vm430 = vcmp.eq.s32.totalorder %v252, 1
        %vm431 = vcmp.eq.s32.totalorder %v256, 1
        %vm432 = vcmp.eq.s32.totalorder %v260, 1
        %vm433 = vcmp.eq.s32.totalorder %v264, 1
        %vm434 = vcmp.eq.s32.totalorder %v268, 1
        %vm435 = vcmp.eq.s32.totalorder %v272, 1
        %vm436 = vcmp.eq.s32.totalorder %v276, 1
        %vm437 = vcmp.eq.s32.totalorder %v280, 1
        %vm438 = vcmp.eq.s32.totalorder %v284, 1
        %vm439 = vcmp.eq.s32.totalorder %v288, 1
        %vm440 = vcmp.eq.s32.totalorder %v292, 1
        %vm441 = vcmp.eq.s32.totalorder %v296, 1
        %vm442 = vcmp.eq.s32.totalorder %v300, 1
        %vm443 = vcmp.eq.s32.totalorder %v304, 1
        %vm444 = vcmp.eq.s32.totalorder %v308, 1
        %vm445 = vcmp.eq.s32.totalorder %v312, 1
        %vm446 = vcmp.eq.s32.totalorder %v316, 1
        %vm447 = vcmp.eq.s32.totalorder %v320, 1
        %vm448 = vcmp.eq.s32.totalorder %v324, 1
        %vm449 = vcmp.eq.s32.totalorder %v328, 1
        %vm450 = vcmp.eq.s32.totalorder %v332, 1
        %vm451 = vcmp.eq.s32.totalorder %v336, 1
        %vm452 = vcmp.eq.s32.totalorder %v340, 1
        %vm453 = vcmp.eq.s32.totalorder %v344, 1
        %vm454 = vcmp.eq.s32.totalorder %v348, 1
        %vm455 = vcmp.eq.s32.totalorder %v352, 1
        %vm456 = vcmp.eq.s32.totalorder %v356, 1
        %vm457 = vcmp.eq.s32.totalorder %v360, 1
        %vm458 = vcmp.eq.s32.totalorder %v364, 1
        %vm459 = vcmp.eq.s32.totalorder %v368, 1
        %vm460 = vcmp.eq.s32.totalorder %v372, 1
        %vm461 = vcmp.eq.s32.totalorder %v376, 1
        %vm462 = vcmp.eq.s32.totalorder %v380, 1
        %vm463 = vcmp.eq.s32.totalorder %v384, 1
        %vm464 = vcmp.eq.s32.totalorder %v388, 1
        %vm465 = vcmp.eq.s32.totalorder %v392, 1
        %vm466 = vcmp.eq.s32.totalorder %v396, 1
        %vm467 = vcmp.eq.s32.totalorder %v400, 1
        %vm468 = vcmp.eq.s32.totalorder %v404, 1
        %vm469 = vcmp.eq.s32.totalorder %v408, 1
        %vm470 = vcmp.eq.s32.totalorder %v412, 1
        %vm471 = vcmp.eq.s32.totalorder %v416, 1
        %vm472 = vcmp.eq.s32.totalorder %v420, 1
        %vm473 = vcmp.eq.s32.totalorder %v424, 1
        %v523 = vrot.slane %v173, 7
        %v524 = vrot.slane %v174, 7
        %v525 = vrot.slane %v175, 7
        %v526 = vrot.slane %v176, 7
        %v527 = vrot.slane %v177, 7
        %v528 = vrot.slane %v178, 7
        %v529 = vrot.slane %v179, 7
        %v530 = vrot.slane %v180, 7
        %v531 = vrot.slane %v181, 7
        %v532 = vrot.slane %v182, 7
        %v533 = vrot.slane %v183, 7
        %v534 = vrot.slane %v184, 7
        %v535 = vrot.slane %v185, 7
        %v536 = vrot.slane %v186, 7
        %v537 = vrot.slane %v187, 7
        %v538 = vrot.slane %v188, 7
        %v539 = vrot.slane %v189, 7
        %v540 = vrot.slane %v190, 7
        %v541 = vrot.slane %v191, 7
        %v542 = vrot.slane %v192, 7
        %v543 = vrot.slane %v193, 7
        %v544 = vrot.slane %v194, 7
        %v545 = vrot.slane %v195, 7
        %v546 = vrot.slane %v196, 7
        %v547 = vrot.slane %v197, 7
        %v548 = vrot.slane %v198, 7
        %v549 = vrot.slane %v199, 7
        %v550 = vrot.slane %v200, 7
        %v551 = vrot.slane %v201, 7
        %v552 = vrot.slane %v202, 7
        %v553 = vrot.slane %v203, 7
        %v554 = vrot.slane %v204, 7
        %v555 = vrot.slane %v205, 7
        %v556 = vrot.slane %v206, 7
        %v557 = vrot.slane %v207, 7
        %v558 = vrot.slane %v208, 7
        %v559 = vrot.slane %v209, 7
        %v560 = vrot.slane %v210, 7
        %v561 = vrot.slane %v211, 7
        %v562 = vrot.slane %v212, 7
        %v563 = vrot.slane %v213, 7
        %v564 = vrot.slane %v214, 7
        %v565 = vrot.slane %v215, 7
        %v566 = vrot.slane %v216, 7
        %v567 = vrot.slane %v217, 7
        %v568 = vrot.slane %v218, 7
        %v569 = vrot.slane %v219, 7
        %v570 = vrot.slane %v220, 7
        %v571 = vrot.slane %v221, 7
        %vm621 = vcmask 1040384
        %v622 = vsel %vm621, %v523, %v523
        %v623 = vsel %vm621, %v524, %v524
        %v624 = vsel %vm621, %v525, %v525
        %v625 = vsel %vm621, %v526, %v526
        %v626 = vsel %vm621, %v527, %v527
        %v627 = vsel %vm621, %v528, %v528
        %v628 = vsel %vm621, %v529, %v529
        %v629 = vsel %vm621, %v530, %v530
        %v630 = vsel %vm621, %v531, %v531
        %v631 = vsel %vm621, %v532, %v532
        %v632 = vsel %vm621, %v533, %v533
        %v633 = vsel %vm621, %v534, %v534
        %v634 = vsel %vm621, %v535, %v535
        %v635 = vsel %vm621, %v536, %v536
        %v636 = vsel %vm621, %v537, %v537
        %v637 = vsel %vm621, %v538, %v538
        %v638 = vsel %vm621, %v539, %v539
        %v639 = vsel %vm621, %v540, %v540
        %v640 = vsel %vm621, %v541, %v541
        %v641 = vsel %vm621, %v542, %v542
        %v642 = vsel %vm621, %v543, %v543
        %v643 = vsel %vm621, %v544, %v544
        %v644 = vsel %vm621, %v545, %v545
        %v645 = vsel %vm621, %v546, %v546
        %v646 = vsel %vm621, %v547, %v547
        %v647 = vsel %vm621, %v548, %v548
        %v648 = vsel %vm621, %v549, %v549
        %v649 = vsel %vm621, %v550, %v550
        %v650 = vsel %vm621, %v551, %v551
        %v651 = vsel %vm621, %v552, %v552
        %v652 = vsel %vm621, %v553, %v553
        %v653 = vsel %vm621, %v554, %v554
        %v654 = vsel %vm621, %v555, %v555
        %v655 = vsel %vm621, %v556, %v556
        %v656 = vsel %vm621, %v557, %v557
        %v657 = vsel %vm621, %v558, %v558
        %v658 = vsel %vm621, %v559, %v559
        %v659 = vsel %vm621, %v560, %v560
        %v660 = vsel %vm621, %v561, %v561
        %v661 = vsel %vm621, %v562, %v562
        %v662 = vsel %vm621, %v563, %v563
        %v663 = vsel %vm621, %v564, %v564
        %v664 = vsel %vm621, %v565, %v565
        %v665 = vsel %vm621, %v566, %v566
        %v666 = vsel %vm621, %v567, %v567
        %v667 = vsel %vm621, %v568, %v568
        %v668 = vsel %vm621, %v569, %v569
        %v669 = vsel %vm621, %v570, %v570
        %v670 = vsel %vm621, %v571, %v571
        %v671 = vsel %vm425, %v622, %v173
        %v672 = vsel %vm426, %v623, %v174
        %v673 = vsel %vm427, %v624, %v175
        %v674 = vsel %vm428, %v625, %v176
        %v675 = vsel %vm429, %v626, %v177
        %v676 = vsel %vm430, %v627, %v178
        %v677 = vsel %vm431, %v628, %v179
        %v678 = vsel %vm432, %v629, %v180
        %v679 = vsel %vm433, %v630, %v181
        %v680 = vsel %vm434, %v631, %v182
        %v681 = vsel %vm435, %v632, %v183
        %v682 = vsel %vm436, %v633, %v184
        %v683 = vsel %vm437, %v634, %v185
        %v684 = vsel %vm438, %v635, %v186
        %v685 = vsel %vm439, %v636, %v187
        %v686 = vsel %vm440, %v637, %v188
        %v687 = vsel %vm441, %v638, %v189
        %v688 = vsel %vm442, %v639, %v190
        %v689 = vsel %vm443, %v640, %v191
        %v690 = vsel %vm444, %v641, %v192
        %v691 = vsel %vm445, %v642, %v193
        %v692 = vsel %vm446, %v643, %v194
        %v693 = vsel %vm447, %v644, %v195
        %v694 = vsel %vm448, %v645, %v196
        %v695 = vsel %vm449, %v646, %v197
        %v696 = vsel %vm450, %v647, %v198
        %v697 = vsel %vm451, %v648, %v199
        %v698 = vsel %vm452, %v649, %v200
        %v699 = vsel %vm453, %v650, %v201
        %v700 = vsel %vm454, %v651, %v202
        %v701 = vsel %vm455, %v652, %v203
        %v702 = vsel %vm456, %v653, %v204
        %v703 = vsel %vm457, %v654, %v205
        %v704 = vsel %vm458, %v655, %v206
        %v705 = vsel %vm459, %v656, %v207
        %v706 = vsel %vm460, %v657, %v208
        %v707 = vsel %vm461, %v658, %v209
        %v708 = vsel %vm462, %v659, %v210
        %v709 = vsel %vm463, %v660, %v211
        %v710 = vsel %vm464, %v661, %v212
        %v711 = vsel %vm465, %v662, %v213
        %v712 = vsel %vm466, %v663, %v214
        %v713 = vsel %vm467, %v664, %v215
        %v714 = vsel %vm468, %v665, %v216
        %v715 = vsel %vm469, %v666, %v217
        %v716 = vsel %vm470, %v667, %v218
        %v717 = vsel %vm471, %v668, %v219
        %v718 = vsel %vm472, %v669, %v220
        %v719 = vsel %vm473, %v670, %v221
        %vm720 = vcmp.eq.s32.totalorder %v232, 2
        %vm721 = vcmp.eq.s32.totalorder %v236, 2
        %vm722 = vcmp.eq.s32.totalorder %v240, 2
        %vm723 = vcmp.eq.s32.totalorder %v244, 2
        %vm724 = vcmp.eq.s32.totalorder %v248, 2
        %vm725 = vcmp.eq.s32.totalorder %v252, 2
        %vm726 = vcmp.eq.s32.totalorder %v256, 2
        %vm727 = vcmp.eq.s32.totalorder %v260, 2
        %vm728 = vcmp.eq.s32.totalorder %v264, 2
        %vm729 = vcmp.eq.s32.totalorder %v268, 2
        %vm730 = vcmp.eq.s32.totalorder %v272, 2
        %vm731 = vcmp.eq.s32.totalorder %v276, 2
        %vm732 = vcmp.eq.s32.totalorder %v280, 2
        %vm733 = vcmp.eq.s32.totalorder %v284, 2
        %vm734 = vcmp.eq.s32.totalorder %v288, 2
        %vm735 = vcmp.eq.s32.totalorder %v292, 2
        %vm736 = vcmp.eq.s32.totalorder %v296, 2
        %vm737 = vcmp.eq.s32.totalorder %v300, 2
        %vm738 = vcmp.eq.s32.totalorder %v304, 2
        %vm739 = vcmp.eq.s32.totalorder %v308, 2
        %vm740 = vcmp.eq.s32.totalorder %v312, 2
        %vm741 = vcmp.eq.s32.totalorder %v316, 2
        %vm742 = vcmp.eq.s32.totalorder %v320, 2
        %vm743 = vcmp.eq.s32.totalorder %v324, 2
        %vm744 = vcmp.eq.s32.totalorder %v328, 2
        %vm745 = vcmp.eq.s32.totalorder %v332, 2
        %vm746 = vcmp.eq.s32.totalorder %v336, 2
        %vm747 = vcmp.eq.s32.totalorder %v340, 2
        %vm748 = vcmp.eq.s32.totalorder %v344, 2
        %vm749 = vcmp.eq.s32.totalorder %v348, 2
        %vm750 = vcmp.eq.s32.totalorder %v352, 2
        %vm751 = vcmp.eq.s32.totalorder %v356, 2
        %vm752 = vcmp.eq.s32.totalorder %v360, 2
        %vm753 = vcmp.eq.s32.totalorder %v364, 2
        %vm754 = vcmp.eq.s32.totalorder %v368, 2
        %vm755 = vcmp.eq.s32.totalorder %v372, 2
        %vm756 = vcmp.eq.s32.totalorder %v376, 2
        %vm757 = vcmp.eq.s32.totalorder %v380, 2
        %vm758 = vcmp.eq.s32.totalorder %v384, 2
        %vm759 = vcmp.eq.s32.totalorder %v388, 2
        %vm760 = vcmp.eq.s32.totalorder %v392, 2
        %vm761 = vcmp.eq.s32.totalorder %v396, 2
        %vm762 = vcmp.eq.s32.totalorder %v400, 2
        %vm763 = vcmp.eq.s32.totalorder %v404, 2
        %vm764 = vcmp.eq.s32.totalorder %v408, 2
        %vm765 = vcmp.eq.s32.totalorder %v412, 2
        %vm766 = vcmp.eq.s32.totalorder %v416, 2
        %vm767 = vcmp.eq.s32.totalorder %v420, 2
        %vm768 = vcmp.eq.s32.totalorder %v424, 2
        %v769 = vrot.slane %v173, 6
        %v770 = vrot.slane %v174, 6
        %v771 = vrot.slane %v175, 6
        %v772 = vrot.slane %v176, 6
        %v773 = vrot.slane %v177, 6
        %v774 = vrot.slane %v178, 6
        %v775 = vrot.slane %v179, 6
        %v776 = vrot.slane %v180, 6
        %v777 = vrot.slane %v181, 6
        %v778 = vrot.slane %v182, 6
        %v779 = vrot.slane %v183, 6
        %v780 = vrot.slane %v184, 6
        %v781 = vrot.slane %v185, 6
        %v782 = vrot.slane %v186, 6
        %v783 = vrot.slane %v187, 6
        %v784 = vrot.slane %v188, 6
        %v785 = vrot.slane %v189, 6
        %v786 = vrot.slane %v190, 6
        %v787 = vrot.slane %v191, 6
        %v788 = vrot.slane %v192, 6
        %v789 = vrot.slane %v193, 6
        %v790 = vrot.slane %v194, 6
        %v791 = vrot.slane %v195, 6
        %v792 = vrot.slane %v196, 6
        %v793 = vrot.slane %v197, 6
        %v794 = vrot.slane %v198, 6
        %v795 = vrot.slane %v199, 6
        %v796 = vrot.slane %v200, 6
        %v797 = vrot.slane %v201, 6
        %v798 = vrot.slane %v202, 6
        %v799 = vrot.slane %v203, 6
        %v800 = vrot.slane %v204, 6
        %v801 = vrot.slane %v205, 6
        %v802 = vrot.slane %v206, 6
        %v803 = vrot.slane %v207, 6
        %v804 = vrot.slane %v208, 6
        %v805 = vrot.slane %v209, 6
        %v806 = vrot.slane %v210, 6
        %v807 = vrot.slane %v211, 6
        %v808 = vrot.slane %v212, 6
        %v809 = vrot.slane %v213, 6
        %v810 = vrot.slane %v214, 6
        %v811 = vrot.slane %v215, 6
        %v812 = vrot.slane %v216, 6
        %v813 = vrot.slane %v217, 6
        %v814 = vrot.slane %v218, 6
        %v815 = vrot.slane %v219, 6
        %v816 = vrot.slane %v220, 6
        %v817 = vrot.slane %v221, 6
        %vm867 = vcmask 1041408
        %v868 = vsel %vm867, %v769, %v769
        %v869 = vsel %vm867, %v770, %v770
        %v870 = vsel %vm867, %v771, %v771
        %v871 = vsel %vm867, %v772, %v772
        %v872 = vsel %vm867, %v773, %v773
        %v873 = vsel %vm867, %v774, %v774
        %v874 = vsel %vm867, %v775, %v775
        %v875 = vsel %vm867, %v776, %v776
        %v876 = vsel %vm867, %v777, %v777
        %v877 = vsel %vm867, %v778, %v778
        %v878 = vsel %vm867, %v779, %v779
        %v879 = vsel %vm867, %v780, %v780
        %v880 = vsel %vm867, %v781, %v781
        %v881 = vsel %vm867, %v782, %v782
        %v882 = vsel %vm867, %v783, %v783
        %v883 = vsel %vm867, %v784, %v784
        %v884 = vsel %vm867, %v785, %v785
        %v885 = vsel %vm867, %v786, %v786
        %v886 = vsel %vm867, %v787, %v787
        %v887 = vsel %vm867, %v788, %v788
        %v888 = vsel %vm867, %v789, %v789
        %v889 = vsel %vm867, %v790, %v790
        %v890 = vsel %vm867, %v791, %v791
        %v891 = vsel %vm867, %v792, %v792
        %v892 = vsel %vm867, %v793, %v793
        %v893 = vsel %vm867, %v794, %v794
        %v894 = vsel %vm867, %v795, %v795
        %v895 = vsel %vm867, %v796, %v796
        %v896 = vsel %vm867, %v797, %v797
        %v897 = vsel %vm867, %v798, %v798
        %v898 = vsel %vm867, %v799, %v799
        %v899 = vsel %vm867, %v800, %v800
        %v900 = vsel %vm867, %v801, %v801
        %v901 = vsel %vm867, %v802, %v802
        %v902 = vsel %vm867, %v803, %v803
        %v903 = vsel %vm867, %v804, %v804
        %v904 = vsel %vm867, %v805, %v805
        %v905 = vsel %vm867, %v806, %v806
        %v906 = vsel %vm867, %v807, %v807
        %v907 = vsel %vm867, %v808, %v808
        %v908 = vsel %vm867, %v809, %v809
        %v909 = vsel %vm867, %v810, %v810
        %v910 = vsel %vm867, %v811, %v811
        %v911 = vsel %vm867, %v812, %v812
        %v912 = vsel %vm867, %v813, %v813
        %v913 = vsel %vm867, %v814, %v814
        %v914 = vsel %vm867, %v815, %v815
        %v915 = vsel %vm867, %v816, %v816
        %v916 = vsel %vm867, %v817, %v817
        %v917 = vsel %vm720, %v868, %v671
        %v918 = vsel %vm721, %v869, %v672
        %v919 = vsel %vm722, %v870, %v673
        %v920 = vsel %vm723, %v871, %v674
        %v921 = vsel %vm724, %v872, %v675
        %v922 = vsel %vm725, %v873, %v676
        %v923 = vsel %vm726, %v874, %v677
        %v924 = vsel %vm727, %v875, %v678
        %v925 = vsel %vm728, %v876, %v679
        %v926 = vsel %vm729, %v877, %v680
        %v927 = vsel %vm730, %v878, %v681
        %v928 = vsel %vm731, %v879, %v682
        %v929 = vsel %vm732, %v880, %v683
        %v930 = vsel %vm733, %v881, %v684
        %v931 = vsel %vm734, %v882, %v685
        %v932 = vsel %vm735, %v883, %v686
        %v933 = vsel %vm736, %v884, %v687
        %v934 = vsel %vm737, %v885, %v688
        %v935 = vsel %vm738, %v886, %v689
        %v936 = vsel %vm739, %v887, %v690
        %v937 = vsel %vm740, %v888, %v691
        %v938 = vsel %vm741, %v889, %v692
        %v939 = vsel %vm742, %v890, %v693
        %v940 = vsel %vm743, %v891, %v694
        %v941 = vsel %vm744, %v892, %v695
        %v942 = vsel %vm745, %v893, %v696
        %v943 = vsel %vm746, %v894, %v697
        %v944 = vsel %vm747, %v895, %v698
        %v945 = vsel %vm748, %v896, %v699
        %v946 = vsel %vm749, %v897, %v700
        %v947 = vsel %vm750, %v898, %v701
        %v948 = vsel %vm751, %v899, %v702
        %v949 = vsel %vm752, %v900, %v703
        %v950 = vsel %vm753, %v901, %v704
        %v951 = vsel %vm754, %v902, %v705
        %v952 = vsel %vm755, %v903, %v706
        %v953 = vsel %vm756, %v904, %v707
        %v954 = vsel %vm757, %v905, %v708
        %v955 = vsel %vm758, %v906, %v709
        %v956 = vsel %vm759, %v907, %v710
        %v957 = vsel %vm760, %v908, %v711
        %v958 = vsel %vm761, %v909, %v712
        %v959 = vsel %vm762, %v910, %v713
        %v960 = vsel %vm763, %v911, %v714
        %v961 = vsel %vm764, %v912, %v715
        %v962 = vsel %vm765, %v913, %v716
        %v963 = vsel %vm766, %v914, %v717
        %v964 = vsel %vm767, %v915, %v718
        %v965 = vsel %vm768, %v916, %v719
        %vm966 = vcmp.eq.s32.totalorder %v232, 3
        %vm967 = vcmp.eq.s32.totalorder %v236, 3
        %vm968 = vcmp.eq.s32.totalorder %v240, 3
        %vm969 = vcmp.eq.s32.totalorder %v244, 3
        %vm970 = vcmp.eq.s32.totalorder %v248, 3
        %vm971 = vcmp.eq.s32.totalorder %v252, 3
        %vm972 = vcmp.eq.s32.totalorder %v256, 3
        %vm973 = vcmp.eq.s32.totalorder %v260, 3
        %vm974 = vcmp.eq.s32.totalorder %v264, 3
        %vm975 = vcmp.eq.s32.totalorder %v268, 3
        %vm976 = vcmp.eq.s32.totalorder %v272, 3
        %vm977 = vcmp.eq.s32.totalorder %v276, 3
        %vm978 = vcmp.eq.s32.totalorder %v280, 3
        %vm979 = vcmp.eq.s32.totalorder %v284, 3
        %vm980 = vcmp.eq.s32.totalorder %v288, 3
        %vm981 = vcmp.eq.s32.totalorder %v292, 3
        %vm982 = vcmp.eq.s32.totalorder %v296, 3
        %vm983 = vcmp.eq.s32.totalorder %v300, 3
        %vm984 = vcmp.eq.s32.totalorder %v304, 3
        %vm985 = vcmp.eq.s32.totalorder %v308, 3
        %vm986 = vcmp.eq.s32.totalorder %v312, 3
        %vm987 = vcmp.eq.s32.totalorder %v316, 3
        %vm988 = vcmp.eq.s32.totalorder %v320, 3
        %vm989 = vcmp.eq.s32.totalorder %v324, 3
        %vm990 = vcmp.eq.s32.totalorder %v328, 3
        %vm991 = vcmp.eq.s32.totalorder %v332, 3
        %vm992 = vcmp.eq.s32.totalorder %v336, 3
        %vm993 = vcmp.eq.s32.totalorder %v340, 3
        %vm994 = vcmp.eq.s32.totalorder %v344, 3
        %vm995 = vcmp.eq.s32.totalorder %v348, 3
        %vm996 = vcmp.eq.s32.totalorder %v352, 3
        %vm997 = vcmp.eq.s32.totalorder %v356, 3
        %vm998 = vcmp.eq.s32.totalorder %v360, 3
        %vm999 = vcmp.eq.s32.totalorder %v364, 3
        %vm1000 = vcmp.eq.s32.totalorder %v368, 3
        %vm1001 = vcmp.eq.s32.totalorder %v372, 3
        %vm1002 = vcmp.eq.s32.totalorder %v376, 3
        %vm1003 = vcmp.eq.s32.totalorder %v380, 3
        %vm1004 = vcmp.eq.s32.totalorder %v384, 3
        %vm1005 = vcmp.eq.s32.totalorder %v388, 3
        %vm1006 = vcmp.eq.s32.totalorder %v392, 3
        %vm1007 = vcmp.eq.s32.totalorder %v396, 3
        %vm1008 = vcmp.eq.s32.totalorder %v400, 3
        %vm1009 = vcmp.eq.s32.totalorder %v404, 3
        %vm1010 = vcmp.eq.s32.totalorder %v408, 3
        %vm1011 = vcmp.eq.s32.totalorder %v412, 3
        %vm1012 = vcmp.eq.s32.totalorder %v416, 3
        %vm1013 = vcmp.eq.s32.totalorder %v420, 3
        %vm1014 = vcmp.eq.s32.totalorder %v424, 3
        %v1015 = vrot.slane %v173, 5
        %v1016 = vrot.slane %v174, 5
        %v1017 = vrot.slane %v175, 5
        %v1018 = vrot.slane %v176, 5
        %v1019 = vrot.slane %v177, 5
        %v1020 = vrot.slane %v178, 5
        %v1021 = vrot.slane %v179, 5
        %v1022 = vrot.slane %v180, 5
        %v1023 = vrot.slane %v181, 5
        %v1024 = vrot.slane %v182, 5
        %v1025 = vrot.slane %v183, 5
        %v1026 = vrot.slane %v184, 5
        %v1027 = vrot.slane %v185, 5
        %v1028 = vrot.slane %v186, 5
        %v1029 = vrot.slane %v187, 5
        %v1030 = vrot.slane %v188, 5
        %v1031 = vrot.slane %v189, 5
        %v1032 = vrot.slane %v190, 5
        %v1033 = vrot.slane %v191, 5
        %v1034 = vrot.slane %v192, 5
        %v1035 = vrot.slane %v193, 5
        %v1036 = vrot.slane %v194, 5
        %v1037 = vrot.slane %v195, 5
        %v1038 = vrot.slane %v196, 5
        %v1039 = vrot.slane %v197, 5
        %v1040 = vrot.slane %v198, 5
        %v1041 = vrot.slane %v199, 5
        %v1042 = vrot.slane %v200, 5
        %v1043 = vrot.slane %v201, 5
        %v1044 = vrot.slane %v202, 5
        %v1045 = vrot.slane %v203, 5
        %v1046 = vrot.slane %v204, 5
        %v1047 = vrot.slane %v205, 5
        %v1048 = vrot.slane %v206, 5
        %v1049 = vrot.slane %v207, 5
        %v1050 = vrot.slane %v208, 5
        %v1051 = vrot.slane %v209, 5
        %v1052 = vrot.slane %v210, 5
        %v1053 = vrot.slane %v211, 5
        %v1054 = vrot.slane %v212, 5
        %v1055 = vrot.slane %v213, 5
        %v1056 = vrot.slane %v214, 5
        %v1057 = vrot.slane %v215, 5
        %v1058 = vrot.slane %v216, 5
        %v1059 = vrot.slane %v217, 5
        %v1060 = vrot.slane %v218, 5
        %v1061 = vrot.slane %v219, 5
        %v1062 = vrot.slane %v220, 5
        %v1063 = vrot.slane %v221, 5
        %vm1113 = vcmask 1042432
        %v1114 = vsel %vm1113, %v1015, %v1015
        %v1115 = vsel %vm1113, %v1016, %v1016
        %v1116 = vsel %vm1113, %v1017, %v1017
        %v1117 = vsel %vm1113, %v1018, %v1018
        %v1118 = vsel %vm1113, %v1019, %v1019
        %v1119 = vsel %vm1113, %v1020, %v1020
        %v1120 = vsel %vm1113, %v1021, %v1021
        %v1121 = vsel %vm1113, %v1022, %v1022
        %v1122 = vsel %vm1113, %v1023, %v1023
        %v1123 = vsel %vm1113, %v1024, %v1024
        %v1124 = vsel %vm1113, %v1025, %v1025
        %v1125 = vsel %vm1113, %v1026, %v1026
        %v1126 = vsel %vm1113, %v1027, %v1027
        %v1127 = vsel %vm1113, %v1028, %v1028
        %v1128 = vsel %vm1113, %v1029, %v1029
        %v1129 = vsel %vm1113, %v1030, %v1030
        %v1130 = vsel %vm1113, %v1031, %v1031
        %v1131 = vsel %vm1113, %v1032, %v1032
        %v1132 = vsel %vm1113, %v1033, %v1033
        %v1133 = vsel %vm1113, %v1034, %v1034
        %v1134 = vsel %vm1113, %v1035, %v1035
        %v1135 = vsel %vm1113, %v1036, %v1036
        %v1136 = vsel %vm1113, %v1037, %v1037
        %v1137 = vsel %vm1113, %v1038, %v1038
        %v1138 = vsel %vm1113, %v1039, %v1039
        %v1139 = vsel %vm1113, %v1040, %v1040
        %v1140 = vsel %vm1113, %v1041, %v1041
        %v1141 = vsel %vm1113, %v1042, %v1042
        %v1142 = vsel %vm1113, %v1043, %v1043
        %v1143 = vsel %vm1113, %v1044, %v1044
        %v1144 = vsel %vm1113, %v1045, %v1045
        %v1145 = vsel %vm1113, %v1046, %v1046
        %v1146 = vsel %vm1113, %v1047, %v1047
        %v1147 = vsel %vm1113, %v1048, %v1048
        %v1148 = vsel %vm1113, %v1049, %v1049
        %v1149 = vsel %vm1113, %v1050, %v1050
        %v1150 = vsel %vm1113, %v1051, %v1051
        %v1151 = vsel %vm1113, %v1052, %v1052
        %v1152 = vsel %vm1113, %v1053, %v1053
        %v1153 = vsel %vm1113, %v1054, %v1054
        %v1154 = vsel %vm1113, %v1055, %v1055
        %v1155 = vsel %vm1113, %v1056, %v1056
        %v1156 = vsel %vm1113, %v1057, %v1057
        %v1157 = vsel %vm1113, %v1058, %v1058
        %v1158 = vsel %vm1113, %v1059, %v1059
        %v1159 = vsel %vm1113, %v1060, %v1060
        %v1160 = vsel %vm1113, %v1061, %v1061
        %v1161 = vsel %vm1113, %v1062, %v1062
        %v1162 = vsel %vm1113, %v1063, %v1063
        %v1163 = vsel %vm966, %v1114, %v917
        %v1164 = vsel %vm967, %v1115, %v918
        %v1165 = vsel %vm968, %v1116, %v919
        %v1166 = vsel %vm969, %v1117, %v920
        %v1167 = vsel %vm970, %v1118, %v921
        %v1168 = vsel %vm971, %v1119, %v922
        %v1169 = vsel %vm972, %v1120, %v923
        %v1170 = vsel %vm973, %v1121, %v924
        %v1171 = vsel %vm974, %v1122, %v925
        %v1172 = vsel %vm975, %v1123, %v926
        %v1173 = vsel %vm976, %v1124, %v927
        %v1174 = vsel %vm977, %v1125, %v928
        %v1175 = vsel %vm978, %v1126, %v929
        %v1176 = vsel %vm979, %v1127, %v930
        %v1177 = vsel %vm980, %v1128, %v931
        %v1178 = vsel %vm981, %v1129, %v932
        %v1179 = vsel %vm982, %v1130, %v933
        %v1180 = vsel %vm983, %v1131, %v934
        %v1181 = vsel %vm984, %v1132, %v935
        %v1182 = vsel %vm985, %v1133, %v936
        %v1183 = vsel %vm986, %v1134, %v937
        %v1184 = vsel %vm987, %v1135, %v938
        %v1185 = vsel %vm988, %v1136, %v939
        %v1186 = vsel %vm989, %v1137, %v940
        %v1187 = vsel %vm990, %v1138, %v941
        %v1188 = vsel %vm991, %v1139, %v942
        %v1189 = vsel %vm992, %v1140, %v943
        %v1190 = vsel %vm993, %v1141, %v944
        %v1191 = vsel %vm994, %v1142, %v945
        %v1192 = vsel %vm995, %v1143, %v946
        %v1193 = vsel %vm996, %v1144, %v947
        %v1194 = vsel %vm997, %v1145, %v948
        %v1195 = vsel %vm998, %v1146, %v949
        %v1196 = vsel %vm999, %v1147, %v950
        %v1197 = vsel %vm1000, %v1148, %v951
        %v1198 = vsel %vm1001, %v1149, %v952
        %v1199 = vsel %vm1002, %v1150, %v953
        %v1200 = vsel %vm1003, %v1151, %v954
        %v1201 = vsel %vm1004, %v1152, %v955
        %v1202 = vsel %vm1005, %v1153, %v956
        %v1203 = vsel %vm1006, %v1154, %v957
        %v1204 = vsel %vm1007, %v1155, %v958
        %v1205 = vsel %vm1008, %v1156, %v959
        %v1206 = vsel %vm1009, %v1157, %v960
        %v1207 = vsel %vm1010, %v1158, %v961
        %v1208 = vsel %vm1011, %v1159, %v962
        %v1209 = vsel %vm1012, %v1160, %v963
        %v1210 = vsel %vm1013, %v1161, %v964
        %v1211 = vsel %vm1014, %v1162, %v965
        %vm1212 = vcmp.eq.s32.totalorder %v232, 4
        %vm1213 = vcmp.eq.s32.totalorder %v236, 4
        %vm1214 = vcmp.eq.s32.totalorder %v240, 4
        %vm1215 = vcmp.eq.s32.totalorder %v244, 4
        %vm1216 = vcmp.eq.s32.totalorder %v248, 4
        %vm1217 = vcmp.eq.s32.totalorder %v252, 4
        %vm1218 = vcmp.eq.s32.totalorder %v256, 4
        %vm1219 = vcmp.eq.s32.totalorder %v260, 4
        %vm1220 = vcmp.eq.s32.totalorder %v264, 4
        %vm1221 = vcmp.eq.s32.totalorder %v268, 4
        %vm1222 = vcmp.eq.s32.totalorder %v272, 4
        %vm1223 = vcmp.eq.s32.totalorder %v276, 4
        %vm1224 = vcmp.eq.s32.totalorder %v280, 4
        %vm1225 = vcmp.eq.s32.totalorder %v284, 4
        %vm1226 = vcmp.eq.s32.totalorder %v288, 4
        %vm1227 = vcmp.eq.s32.totalorder %v292, 4
        %vm1228 = vcmp.eq.s32.totalorder %v296, 4
        %vm1229 = vcmp.eq.s32.totalorder %v300, 4
        %vm1230 = vcmp.eq.s32.totalorder %v304, 4
        %vm1231 = vcmp.eq.s32.totalorder %v308, 4
        %vm1232 = vcmp.eq.s32.totalorder %v312, 4
        %vm1233 = vcmp.eq.s32.totalorder %v316, 4
        %vm1234 = vcmp.eq.s32.totalorder %v320, 4
        %vm1235 = vcmp.eq.s32.totalorder %v324, 4
        %vm1236 = vcmp.eq.s32.totalorder %v328, 4
        %vm1237 = vcmp.eq.s32.totalorder %v332, 4
        %vm1238 = vcmp.eq.s32.totalorder %v336, 4
        %vm1239 = vcmp.eq.s32.totalorder %v340, 4
        %vm1240 = vcmp.eq.s32.totalorder %v344, 4
        %vm1241 = vcmp.eq.s32.totalorder %v348, 4
        %vm1242 = vcmp.eq.s32.totalorder %v352, 4
        %vm1243 = vcmp.eq.s32.totalorder %v356, 4
        %vm1244 = vcmp.eq.s32.totalorder %v360, 4
        %vm1245 = vcmp.eq.s32.totalorder %v364, 4
        %vm1246 = vcmp.eq.s32.totalorder %v368, 4
        %vm1247 = vcmp.eq.s32.totalorder %v372, 4
        %vm1248 = vcmp.eq.s32.totalorder %v376, 4
        %vm1249 = vcmp.eq.s32.totalorder %v380, 4
        %vm1250 = vcmp.eq.s32.totalorder %v384, 4
        %vm1251 = vcmp.eq.s32.totalorder %v388, 4
        %vm1252 = vcmp.eq.s32.totalorder %v392, 4
        %vm1253 = vcmp.eq.s32.totalorder %v396, 4
        %vm1254 = vcmp.eq.s32.totalorder %v400, 4
        %vm1255 = vcmp.eq.s32.totalorder %v404, 4
        %vm1256 = vcmp.eq.s32.totalorder %v408, 4
        %vm1257 = vcmp.eq.s32.totalorder %v412, 4
        %vm1258 = vcmp.eq.s32.totalorder %v416, 4
        %vm1259 = vcmp.eq.s32.totalorder %v420, 4
        %vm1260 = vcmp.eq.s32.totalorder %v424, 4
        %v1261 = vrot.slane %v173, 4
        %v1262 = vrot.slane %v174, 4
        %v1263 = vrot.slane %v175, 4
        %v1264 = vrot.slane %v176, 4
        %v1265 = vrot.slane %v177, 4
        %v1266 = vrot.slane %v178, 4
        %v1267 = vrot.slane %v179, 4
        %v1268 = vrot.slane %v180, 4
        %v1269 = vrot.slane %v181, 4
        %v1270 = vrot.slane %v182, 4
        %v1271 = vrot.slane %v183, 4
        %v1272 = vrot.slane %v184, 4
        %v1273 = vrot.slane %v185, 4
        %v1274 = vrot.slane %v186, 4
        %v1275 = vrot.slane %v187, 4
        %v1276 = vrot.slane %v188, 4
        %v1277 = vrot.slane %v189, 4
        %v1278 = vrot.slane %v190, 4
        %v1279 = vrot.slane %v191, 4
        %v1280 = vrot.slane %v192, 4
        %v1281 = vrot.slane %v193, 4
        %v1282 = vrot.slane %v194, 4
        %v1283 = vrot.slane %v195, 4
        %v1284 = vrot.slane %v196, 4
        %v1285 = vrot.slane %v197, 4
        %v1286 = vrot.slane %v198, 4
        %v1287 = vrot.slane %v199, 4
        %v1288 = vrot.slane %v200, 4
        %v1289 = vrot.slane %v201, 4
        %v1290 = vrot.slane %v202, 4
        %v1291 = vrot.slane %v203, 4
        %v1292 = vrot.slane %v204, 4
        %v1293 = vrot.slane %v205, 4
        %v1294 = vrot.slane %v206, 4
        %v1295 = vrot.slane %v207, 4
        %v1296 = vrot.slane %v208, 4
        %v1297 = vrot.slane %v209, 4
        %v1298 = vrot.slane %v210, 4
        %v1299 = vrot.slane %v211, 4
        %v1300 = vrot.slane %v212, 4
        %v1301 = vrot.slane %v213, 4
        %v1302 = vrot.slane %v214, 4
        %v1303 = vrot.slane %v215, 4
        %v1304 = vrot.slane %v216, 4
        %v1305 = vrot.slane %v217, 4
        %v1306 = vrot.slane %v218, 4
        %v1307 = vrot.slane %v219, 4
        %v1308 = vrot.slane %v220, 4
        %v1309 = vrot.slane %v221, 4
        %vm1359 = vcmask 1043456
        %v1360 = vsel %vm1359, %v1261, %v1261
        %v1361 = vsel %vm1359, %v1262, %v1262
        %v1362 = vsel %vm1359, %v1263, %v1263
        %v1363 = vsel %vm1359, %v1264, %v1264
        %v1364 = vsel %vm1359, %v1265, %v1265
        %v1365 = vsel %vm1359, %v1266, %v1266
        %v1366 = vsel %vm1359, %v1267, %v1267
        %v1367 = vsel %vm1359, %v1268, %v1268
        %v1368 = vsel %vm1359, %v1269, %v1269
        %v1369 = vsel %vm1359, %v1270, %v1270
        %v1370 = vsel %vm1359, %v1271, %v1271
        %v1371 = vsel %vm1359, %v1272, %v1272
        %v1372 = vsel %vm1359, %v1273, %v1273
        %v1373 = vsel %vm1359, %v1274, %v1274
        %v1374 = vsel %vm1359, %v1275, %v1275
        %v1375 = vsel %vm1359, %v1276, %v1276
        %v1376 = vsel %vm1359, %v1277, %v1277
        %v1377 = vsel %vm1359, %v1278, %v1278
        %v1378 = vsel %vm1359, %v1279, %v1279
        %v1379 = vsel %vm1359, %v1280, %v1280
        %v1380 = vsel %vm1359, %v1281, %v1281
        %v1381 = vsel %vm1359, %v1282, %v1282
        %v1382 = vsel %vm1359, %v1283, %v1283
        %v1383 = vsel %vm1359, %v1284, %v1284
        %v1384 = vsel %vm1359, %v1285, %v1285
        %v1385 = vsel %vm1359, %v1286, %v1286
        %v1386 = vsel %vm1359, %v1287, %v1287
        %v1387 = vsel %vm1359, %v1288, %v1288
        %v1388 = vsel %vm1359, %v1289, %v1289
        %v1389 = vsel %vm1359, %v1290, %v1290
        %v1390 = vsel %vm1359, %v1291, %v1291
        %v1391 = vsel %vm1359, %v1292, %v1292
        %v1392 = vsel %vm1359, %v1293, %v1293
        %v1393 = vsel %vm1359, %v1294, %v1294
        %v1394 = vsel %vm1359, %v1295, %v1295
        %v1395 = vsel %vm1359, %v1296, %v1296
        %v1396 = vsel %vm1359, %v1297, %v1297
        %v1397 = vsel %vm1359, %v1298, %v1298
        %v1398 = vsel %vm1359, %v1299, %v1299
        %v1399 = vsel %vm1359, %v1300, %v1300
        %v1400 = vsel %vm1359, %v1301, %v1301
        %v1401 = vsel %vm1359, %v1302, %v1302
        %v1402 = vsel %vm1359, %v1303, %v1303
        %v1403 = vsel %vm1359, %v1304, %v1304
        %v1404 = vsel %vm1359, %v1305, %v1305
        %v1405 = vsel %vm1359, %v1306, %v1306
        %v1406 = vsel %vm1359, %v1307, %v1307
        %v1407 = vsel %vm1359, %v1308, %v1308
        %v1408 = vsel %vm1359, %v1309, %v1309
        %v1409 = vsel %vm1212, %v1360, %v1163
        %v1410 = vsel %vm1213, %v1361, %v1164
        %v1411 = vsel %vm1214, %v1362, %v1165
        %v1412 = vsel %vm1215, %v1363, %v1166
        %v1413 = vsel %vm1216, %v1364, %v1167
        %v1414 = vsel %vm1217, %v1365, %v1168
        %v1415 = vsel %vm1218, %v1366, %v1169
        %v1416 = vsel %vm1219, %v1367, %v1170
        %v1417 = vsel %vm1220, %v1368, %v1171
        %v1418 = vsel %vm1221, %v1369, %v1172
        %v1419 = vsel %vm1222, %v1370, %v1173
        %v1420 = vsel %vm1223, %v1371, %v1174
        %v1421 = vsel %vm1224, %v1372, %v1175
        %v1422 = vsel %vm1225, %v1373, %v1176
        %v1423 = vsel %vm1226, %v1374, %v1177
        %v1424 = vsel %vm1227, %v1375, %v1178
        %v1425 = vsel %vm1228, %v1376, %v1179
        %v1426 = vsel %vm1229, %v1377, %v1180
        %v1427 = vsel %vm1230, %v1378, %v1181
        %v1428 = vsel %vm1231, %v1379, %v1182
        %v1429 = vsel %vm1232, %v1380, %v1183
        %v1430 = vsel %vm1233, %v1381, %v1184
        %v1431 = vsel %vm1234, %v1382, %v1185
        %v1432 = vsel %vm1235, %v1383, %v1186
        %v1433 = vsel %vm1236, %v1384, %v1187
        %v1434 = vsel %vm1237, %v1385, %v1188
        %v1435 = vsel %vm1238, %v1386, %v1189
        %v1436 = vsel %vm1239, %v1387, %v1190
        %v1437 = vsel %vm1240, %v1388, %v1191
        %v1438 = vsel %vm1241, %v1389, %v1192
        %v1439 = vsel %vm1242, %v1390, %v1193
        %v1440 = vsel %vm1243, %v1391, %v1194
        %v1441 = vsel %vm1244, %v1392, %v1195
        %v1442 = vsel %vm1245, %v1393, %v1196
        %v1443 = vsel %vm1246, %v1394, %v1197
        %v1444 = vsel %vm1247, %v1395, %v1198
        %v1445 = vsel %vm1248, %v1396, %v1199
        %v1446 = vsel %vm1249, %v1397, %v1200
        %v1447 = vsel %vm1250, %v1398, %v1201
        %v1448 = vsel %vm1251, %v1399, %v1202
        %v1449 = vsel %vm1252, %v1400, %v1203
        %v1450 = vsel %vm1253, %v1401, %v1204
        %v1451 = vsel %vm1254, %v1402, %v1205
        %v1452 = vsel %vm1255, %v1403, %v1206
        %v1453 = vsel %vm1256, %v1404, %v1207
        %v1454 = vsel %vm1257, %v1405, %v1208
        %v1455 = vsel %vm1258, %v1406, %v1209
        %v1456 = vsel %vm1259, %v1407, %v1210
        %v1457 = vsel %vm1260, %v1408, %v1211
        %vm1458 = vcmp.eq.s32.totalorder %v232, 5
        %vm1459 = vcmp.eq.s32.totalorder %v236, 5
        %vm1460 = vcmp.eq.s32.totalorder %v240, 5
        %vm1461 = vcmp.eq.s32.totalorder %v244, 5
        %vm1462 = vcmp.eq.s32.totalorder %v248, 5
        %vm1463 = vcmp.eq.s32.totalorder %v252, 5
        %vm1464 = vcmp.eq.s32.totalorder %v256, 5
        %vm1465 = vcmp.eq.s32.totalorder %v260, 5
        %vm1466 = vcmp.eq.s32.totalorder %v264, 5
        %vm1467 = vcmp.eq.s32.totalorder %v268, 5
        %vm1468 = vcmp.eq.s32.totalorder %v272, 5
        %vm1469 = vcmp.eq.s32.totalorder %v276, 5
        %vm1470 = vcmp.eq.s32.totalorder %v280, 5
        %vm1471 = vcmp.eq.s32.totalorder %v284, 5
        %vm1472 = vcmp.eq.s32.totalorder %v288, 5
        %vm1473 = vcmp.eq.s32.totalorder %v292, 5
        %vm1474 = vcmp.eq.s32.totalorder %v296, 5
        %vm1475 = vcmp.eq.s32.totalorder %v300, 5
        %vm1476 = vcmp.eq.s32.totalorder %v304, 5
        %vm1477 = vcmp.eq.s32.totalorder %v308, 5
        %vm1478 = vcmp.eq.s32.totalorder %v312, 5
        %vm1479 = vcmp.eq.s32.totalorder %v316, 5
        %vm1480 = vcmp.eq.s32.totalorder %v320, 5
        %vm1481 = vcmp.eq.s32.totalorder %v324, 5
        %vm1482 = vcmp.eq.s32.totalorder %v328, 5
        %vm1483 = vcmp.eq.s32.totalorder %v332, 5
        %vm1484 = vcmp.eq.s32.totalorder %v336, 5
        %vm1485 = vcmp.eq.s32.totalorder %v340, 5
        %vm1486 = vcmp.eq.s32.totalorder %v344, 5
        %vm1487 = vcmp.eq.s32.totalorder %v348, 5
        %vm1488 = vcmp.eq.s32.totalorder %v352, 5
        %vm1489 = vcmp.eq.s32.totalorder %v356, 5
        %vm1490 = vcmp.eq.s32.totalorder %v360, 5
        %vm1491 = vcmp.eq.s32.totalorder %v364, 5
        %vm1492 = vcmp.eq.s32.totalorder %v368, 5
        %vm1493 = vcmp.eq.s32.totalorder %v372, 5
        %vm1494 = vcmp.eq.s32.totalorder %v376, 5
        %vm1495 = vcmp.eq.s32.totalorder %v380, 5
        %vm1496 = vcmp.eq.s32.totalorder %v384, 5
        %vm1497 = vcmp.eq.s32.totalorder %v388, 5
        %vm1498 = vcmp.eq.s32.totalorder %v392, 5
        %vm1499 = vcmp.eq.s32.totalorder %v396, 5
        %vm1500 = vcmp.eq.s32.totalorder %v400, 5
        %vm1501 = vcmp.eq.s32.totalorder %v404, 5
        %vm1502 = vcmp.eq.s32.totalorder %v408, 5
        %vm1503 = vcmp.eq.s32.totalorder %v412, 5
        %vm1504 = vcmp.eq.s32.totalorder %v416, 5
        %vm1505 = vcmp.eq.s32.totalorder %v420, 5
        %vm1506 = vcmp.eq.s32.totalorder %v424, 5
        %v1507 = vrot.slane %v173, 3
        %v1508 = vrot.slane %v174, 3
        %v1509 = vrot.slane %v175, 3
        %v1510 = vrot.slane %v176, 3
        %v1511 = vrot.slane %v177, 3
        %v1512 = vrot.slane %v178, 3
        %v1513 = vrot.slane %v179, 3
        %v1514 = vrot.slane %v180, 3
        %v1515 = vrot.slane %v181, 3
        %v1516 = vrot.slane %v182, 3
        %v1517 = vrot.slane %v183, 3
        %v1518 = vrot.slane %v184, 3
        %v1519 = vrot.slane %v185, 3
        %v1520 = vrot.slane %v186, 3
        %v1521 = vrot.slane %v187, 3
        %v1522 = vrot.slane %v188, 3
        %v1523 = vrot.slane %v189, 3
        %v1524 = vrot.slane %v190, 3
        %v1525 = vrot.slane %v191, 3
        %v1526 = vrot.slane %v192, 3
        %v1527 = vrot.slane %v193, 3
        %v1528 = vrot.slane %v194, 3
        %v1529 = vrot.slane %v195, 3
        %v1530 = vrot.slane %v196, 3
        %v1531 = vrot.slane %v197, 3
        %v1532 = vrot.slane %v198, 3
        %v1533 = vrot.slane %v199, 3
        %v1534 = vrot.slane %v200, 3
        %v1535 = vrot.slane %v201, 3
        %v1536 = vrot.slane %v202, 3
        %v1537 = vrot.slane %v203, 3
        %v1538 = vrot.slane %v204, 3
        %v1539 = vrot.slane %v205, 3
        %v1540 = vrot.slane %v206, 3
        %v1541 = vrot.slane %v207, 3
        %v1542 = vrot.slane %v208, 3
        %v1543 = vrot.slane %v209, 3
        %v1544 = vrot.slane %v210, 3
        %v1545 = vrot.slane %v211, 3
        %v1546 = vrot.slane %v212, 3
        %v1547 = vrot.slane %v213, 3
        %v1548 = vrot.slane %v214, 3
        %v1549 = vrot.slane %v215, 3
        %v1550 = vrot.slane %v216, 3
        %v1551 = vrot.slane %v217, 3
        %v1552 = vrot.slane %v218, 3
        %v1553 = vrot.slane %v219, 3
        %v1554 = vrot.slane %v220, 3
        %v1555 = vrot.slane %v221, 3
        %vm1605 = vcmask 1044480
        %v1606 = vsel %vm1605, %v1507, %v1507
        %v1607 = vsel %vm1605, %v1508, %v1508
        %v1608 = vsel %vm1605, %v1509, %v1509
        %v1609 = vsel %vm1605, %v1510, %v1510
        %v1610 = vsel %vm1605, %v1511, %v1511
        %v1611 = vsel %vm1605, %v1512, %v1512
        %v1612 = vsel %vm1605, %v1513, %v1513
        %v1613 = vsel %vm1605, %v1514, %v1514
        %v1614 = vsel %vm1605, %v1515, %v1515
        %v1615 = vsel %vm1605, %v1516, %v1516
        %v1616 = vsel %vm1605, %v1517, %v1517
        %v1617 = vsel %vm1605, %v1518, %v1518
        %v1618 = vsel %vm1605, %v1519, %v1519
        %v1619 = vsel %vm1605, %v1520, %v1520
        %v1620 = vsel %vm1605, %v1521, %v1521
        %v1621 = vsel %vm1605, %v1522, %v1522
        %v1622 = vsel %vm1605, %v1523, %v1523
        %v1623 = vsel %vm1605, %v1524, %v1524
        %v1624 = vsel %vm1605, %v1525, %v1525
        %v1625 = vsel %vm1605, %v1526, %v1526
        %v1626 = vsel %vm1605, %v1527, %v1527
        %v1627 = vsel %vm1605, %v1528, %v1528
        %v1628 = vsel %vm1605, %v1529, %v1529
        %v1629 = vsel %vm1605, %v1530, %v1530
        %v1630 = vsel %vm1605, %v1531, %v1531
        %v1631 = vsel %vm1605, %v1532, %v1532
        %v1632 = vsel %vm1605, %v1533, %v1533
        %v1633 = vsel %vm1605, %v1534, %v1534
        %v1634 = vsel %vm1605, %v1535, %v1535
        %v1635 = vsel %vm1605, %v1536, %v1536
        %v1636 = vsel %vm1605, %v1537, %v1537
        %v1637 = vsel %vm1605, %v1538, %v1538
        %v1638 = vsel %vm1605, %v1539, %v1539
        %v1639 = vsel %vm1605, %v1540, %v1540
        %v1640 = vsel %vm1605, %v1541, %v1541
        %v1641 = vsel %vm1605, %v1542, %v1542
        %v1642 = vsel %vm1605, %v1543, %v1543
        %v1643 = vsel %vm1605, %v1544, %v1544
        %v1644 = vsel %vm1605, %v1545, %v1545
        %v1645 = vsel %vm1605, %v1546, %v1546
        %v1646 = vsel %vm1605, %v1547, %v1547
        %v1647 = vsel %vm1605, %v1548, %v1548
        %v1648 = vsel %vm1605, %v1549, %v1549
        %v1649 = vsel %vm1605, %v1550, %v1550
        %v1650 = vsel %vm1605, %v1551, %v1551
        %v1651 = vsel %vm1605, %v1552, %v1552
        %v1652 = vsel %vm1605, %v1553, %v1553
        %v1653 = vsel %vm1605, %v1554, %v1554
        %v1654 = vsel %vm1605, %v1555, %v1555
        %v1655 = vsel %vm1458, %v1606, %v1409
        %v1656 = vsel %vm1459, %v1607, %v1410
        %v1657 = vsel %vm1460, %v1608, %v1411
        %v1658 = vsel %vm1461, %v1609, %v1412
        %v1659 = vsel %vm1462, %v1610, %v1413
        %v1660 = vsel %vm1463, %v1611, %v1414
        %v1661 = vsel %vm1464, %v1612, %v1415
        %v1662 = vsel %vm1465, %v1613, %v1416
        %v1663 = vsel %vm1466, %v1614, %v1417
        %v1664 = vsel %vm1467, %v1615, %v1418
        %v1665 = vsel %vm1468, %v1616, %v1419
        %v1666 = vsel %vm1469, %v1617, %v1420
        %v1667 = vsel %vm1470, %v1618, %v1421
        %v1668 = vsel %vm1471, %v1619, %v1422
        %v1669 = vsel %vm1472, %v1620, %v1423
        %v1670 = vsel %vm1473, %v1621, %v1424
        %v1671 = vsel %vm1474, %v1622, %v1425
        %v1672 = vsel %vm1475, %v1623, %v1426
        %v1673 = vsel %vm1476, %v1624, %v1427
        %v1674 = vsel %vm1477, %v1625, %v1428
        %v1675 = vsel %vm1478, %v1626, %v1429
        %v1676 = vsel %vm1479, %v1627, %v1430
        %v1677 = vsel %vm1480, %v1628, %v1431
        %v1678 = vsel %vm1481, %v1629, %v1432
        %v1679 = vsel %vm1482, %v1630, %v1433
        %v1680 = vsel %vm1483, %v1631, %v1434
        %v1681 = vsel %vm1484, %v1632, %v1435
        %v1682 = vsel %vm1485, %v1633, %v1436
        %v1683 = vsel %vm1486, %v1634, %v1437
        %v1684 = vsel %vm1487, %v1635, %v1438
        %v1685 = vsel %vm1488, %v1636, %v1439
        %v1686 = vsel %vm1489, %v1637, %v1440
        %v1687 = vsel %vm1490, %v1638, %v1441
        %v1688 = vsel %vm1491, %v1639, %v1442
        %v1689 = vsel %vm1492, %v1640, %v1443
        %v1690 = vsel %vm1493, %v1641, %v1444
        %v1691 = vsel %vm1494, %v1642, %v1445
        %v1692 = vsel %vm1495, %v1643, %v1446
        %v1693 = vsel %vm1496, %v1644, %v1447
        %v1694 = vsel %vm1497, %v1645, %v1448
        %v1695 = vsel %vm1498, %v1646, %v1449
        %v1696 = vsel %vm1499, %v1647, %v1450
        %v1697 = vsel %vm1500, %v1648, %v1451
        %v1698 = vsel %vm1501, %v1649, %v1452
        %v1699 = vsel %vm1502, %v1650, %v1453
        %v1700 = vsel %vm1503, %v1651, %v1454
        %v1701 = vsel %vm1504, %v1652, %v1455
        %v1702 = vsel %vm1505, %v1653, %v1456
        %v1703 = vsel %vm1506, %v1654, %v1457
        %vm1704 = vcmp.eq.s32.totalorder %v232, 6
        %vm1705 = vcmp.eq.s32.totalorder %v236, 6
        %vm1706 = vcmp.eq.s32.totalorder %v240, 6
        %vm1707 = vcmp.eq.s32.totalorder %v244, 6
        %vm1708 = vcmp.eq.s32.totalorder %v248, 6
        %vm1709 = vcmp.eq.s32.totalorder %v252, 6
        %vm1710 = vcmp.eq.s32.totalorder %v256, 6
        %vm1711 = vcmp.eq.s32.totalorder %v260, 6
        %vm1712 = vcmp.eq.s32.totalorder %v264, 6
        %vm1713 = vcmp.eq.s32.totalorder %v268, 6
        %vm1714 = vcmp.eq.s32.totalorder %v272, 6
        %vm1715 = vcmp.eq.s32.totalorder %v276, 6
        %vm1716 = vcmp.eq.s32.totalorder %v280, 6
        %vm1717 = vcmp.eq.s32.totalorder %v284, 6
        %vm1718 = vcmp.eq.s32.totalorder %v288, 6
        %vm1719 = vcmp.eq.s32.totalorder %v292, 6
        %vm1720 = vcmp.eq.s32.totalorder %v296, 6
        %vm1721 = vcmp.eq.s32.totalorder %v300, 6
        %vm1722 = vcmp.eq.s32.totalorder %v304, 6
        %vm1723 = vcmp.eq.s32.totalorder %v308, 6
        %vm1724 = vcmp.eq.s32.totalorder %v312, 6
        %vm1725 = vcmp.eq.s32.totalorder %v316, 6
        %vm1726 = vcmp.eq.s32.totalorder %v320, 6
        %vm1727 = vcmp.eq.s32.totalorder %v324, 6
        %vm1728 = vcmp.eq.s32.totalorder %v328, 6
        %vm1729 = vcmp.eq.s32.totalorder %v332, 6
        %vm1730 = vcmp.eq.s32.totalorder %v336, 6
        %vm1731 = vcmp.eq.s32.totalorder %v340, 6
        %vm1732 = vcmp.eq.s32.totalorder %v344, 6
        %vm1733 = vcmp.eq.s32.totalorder %v348, 6
        %vm1734 = vcmp.eq.s32.totalorder %v352, 6
        %vm1735 = vcmp.eq.s32.totalorder %v356, 6
        %vm1736 = vcmp.eq.s32.totalorder %v360, 6
        %vm1737 = vcmp.eq.s32.totalorder %v364, 6
        %vm1738 = vcmp.eq.s32.totalorder %v368, 6
        %vm1739 = vcmp.eq.s32.totalorder %v372, 6
        %vm1740 = vcmp.eq.s32.totalorder %v376, 6
        %vm1741 = vcmp.eq.s32.totalorder %v380, 6
        %vm1742 = vcmp.eq.s32.totalorder %v384, 6
        %vm1743 = vcmp.eq.s32.totalorder %v388, 6
        %vm1744 = vcmp.eq.s32.totalorder %v392, 6
        %vm1745 = vcmp.eq.s32.totalorder %v396, 6
        %vm1746 = vcmp.eq.s32.totalorder %v400, 6
        %vm1747 = vcmp.eq.s32.totalorder %v404, 6
        %vm1748 = vcmp.eq.s32.totalorder %v408, 6
        %vm1749 = vcmp.eq.s32.totalorder %v412, 6
        %vm1750 = vcmp.eq.s32.totalorder %v416, 6
        %vm1751 = vcmp.eq.s32.totalorder %v420, 6
        %vm1752 = vcmp.eq.s32.totalorder %v424, 6
        %v1753 = vrot.slane %v173, 2
        %v1754 = vrot.slane %v174, 2
        %v1755 = vrot.slane %v175, 2
        %v1756 = vrot.slane %v176, 2
        %v1757 = vrot.slane %v177, 2
        %v1758 = vrot.slane %v178, 2
        %v1759 = vrot.slane %v179, 2
        %v1760 = vrot.slane %v180, 2
        %v1761 = vrot.slane %v181, 2
        %v1762 = vrot.slane %v182, 2
        %v1763 = vrot.slane %v183, 2
        %v1764 = vrot.slane %v184, 2
        %v1765 = vrot.slane %v185, 2
        %v1766 = vrot.slane %v186, 2
        %v1767 = vrot.slane %v187, 2
        %v1768 = vrot.slane %v188, 2
        %v1769 = vrot.slane %v189, 2
        %v1770 = vrot.slane %v190, 2
        %v1771 = vrot.slane %v191, 2
        %v1772 = vrot.slane %v192, 2
        %v1773 = vrot.slane %v193, 2
        %v1774 = vrot.slane %v194, 2
        %v1775 = vrot.slane %v195, 2
        %v1776 = vrot.slane %v196, 2
        %v1777 = vrot.slane %v197, 2
        %v1778 = vrot.slane %v198, 2
        %v1779 = vrot.slane %v199, 2
        %v1780 = vrot.slane %v200, 2
        %v1781 = vrot.slane %v201, 2
        %v1782 = vrot.slane %v202, 2
        %v1783 = vrot.slane %v203, 2
        %v1784 = vrot.slane %v204, 2
        %v1785 = vrot.slane %v205, 2
        %v1786 = vrot.slane %v206, 2
        %v1787 = vrot.slane %v207, 2
        %v1788 = vrot.slane %v208, 2
        %v1789 = vrot.slane %v209, 2
        %v1790 = vrot.slane %v210, 2
        %v1791 = vrot.slane %v211, 2
        %v1792 = vrot.slane %v212, 2
        %v1793 = vrot.slane %v213, 2
        %v1794 = vrot.slane %v214, 2
        %v1795 = vrot.slane %v215, 2
        %v1796 = vrot.slane %v216, 2
        %v1797 = vrot.slane %v217, 2
        %v1798 = vrot.slane %v218, 2
        %v1799 = vrot.slane %v219, 2
        %v1800 = vrot.slane %v220, 2
        %v1801 = vrot.slane %v221, 2
        %vm1851 = vcmask 1045504
        %v1852 = vsel %vm1851, %v1753, %v1753
        %v1853 = vsel %vm1851, %v1754, %v1754
        %v1854 = vsel %vm1851, %v1755, %v1755
        %v1855 = vsel %vm1851, %v1756, %v1756
        %v1856 = vsel %vm1851, %v1757, %v1757
        %v1857 = vsel %vm1851, %v1758, %v1758
        %v1858 = vsel %vm1851, %v1759, %v1759
        %v1859 = vsel %vm1851, %v1760, %v1760
        %v1860 = vsel %vm1851, %v1761, %v1761
        %v1861 = vsel %vm1851, %v1762, %v1762
        %v1862 = vsel %vm1851, %v1763, %v1763
        %v1863 = vsel %vm1851, %v1764, %v1764
        %v1864 = vsel %vm1851, %v1765, %v1765
        %v1865 = vsel %vm1851, %v1766, %v1766
        %v1866 = vsel %vm1851, %v1767, %v1767
        %v1867 = vsel %vm1851, %v1768, %v1768
        %v1868 = vsel %vm1851, %v1769, %v1769
        %v1869 = vsel %vm1851, %v1770, %v1770
        %v1870 = vsel %vm1851, %v1771, %v1771
        %v1871 = vsel %vm1851, %v1772, %v1772
        %v1872 = vsel %vm1851, %v1773, %v1773
        %v1873 = vsel %vm1851, %v1774, %v1774
        %v1874 = vsel %vm1851, %v1775, %v1775
        %v1875 = vsel %vm1851, %v1776, %v1776
        %v1876 = vsel %vm1851, %v1777, %v1777
        %v1877 = vsel %vm1851, %v1778, %v1778
        %v1878 = vsel %vm1851, %v1779, %v1779
        %v1879 = vsel %vm1851, %v1780, %v1780
        %v1880 = vsel %vm1851, %v1781, %v1781
        %v1881 = vsel %vm1851, %v1782, %v1782
        %v1882 = vsel %vm1851, %v1783, %v1783
        %v1883 = vsel %vm1851, %v1784, %v1784
        %v1884 = vsel %vm1851, %v1785, %v1785
        %v1885 = vsel %vm1851, %v1786, %v1786
        %v1886 = vsel %vm1851, %v1787, %v1787
        %v1887 = vsel %vm1851, %v1788, %v1788
        %v1888 = vsel %vm1851, %v1789, %v1789
        %v1889 = vsel %vm1851, %v1790, %v1790
        %v1890 = vsel %vm1851, %v1791, %v1791
        %v1891 = vsel %vm1851, %v1792, %v1792
        %v1892 = vsel %vm1851, %v1793, %v1793
        %v1893 = vsel %vm1851, %v1794, %v1794
        %v1894 = vsel %vm1851, %v1795, %v1795
        %v1895 = vsel %vm1851, %v1796, %v1796
        %v1896 = vsel %vm1851, %v1797, %v1797
        %v1897 = vsel %vm1851, %v1798, %v1798
        %v1898 = vsel %vm1851, %v1799, %v1799
        %v1899 = vsel %vm1851, %v1800, %v1800
        %v1900 = vsel %vm1851, %v1801, %v1801
        %v1901 = vsel %vm1704, %v1852, %v1655
        %v1902 = vsel %vm1705, %v1853, %v1656
        %v1903 = vsel %vm1706, %v1854, %v1657
        %v1904 = vsel %vm1707, %v1855, %v1658
        %v1905 = vsel %vm1708, %v1856, %v1659
        %v1906 = vsel %vm1709, %v1857, %v1660
        %v1907 = vsel %vm1710, %v1858, %v1661
        %v1908 = vsel %vm1711, %v1859, %v1662
        %v1909 = vsel %vm1712, %v1860, %v1663
        %v1910 = vsel %vm1713, %v1861, %v1664
        %v1911 = vsel %vm1714, %v1862, %v1665
        %v1912 = vsel %vm1715, %v1863, %v1666
        %v1913 = vsel %vm1716, %v1864, %v1667
        %v1914 = vsel %vm1717, %v1865, %v1668
        %v1915 = vsel %vm1718, %v1866, %v1669
        %v1916 = vsel %vm1719, %v1867, %v1670
        %v1917 = vsel %vm1720, %v1868, %v1671
        %v1918 = vsel %vm1721, %v1869, %v1672
        %v1919 = vsel %vm1722, %v1870, %v1673
        %v1920 = vsel %vm1723, %v1871, %v1674
        %v1921 = vsel %vm1724, %v1872, %v1675
        %v1922 = vsel %vm1725, %v1873, %v1676
        %v1923 = vsel %vm1726, %v1874, %v1677
        %v1924 = vsel %vm1727, %v1875, %v1678
        %v1925 = vsel %vm1728, %v1876, %v1679
        %v1926 = vsel %vm1729, %v1877, %v1680
        %v1927 = vsel %vm1730, %v1878, %v1681
        %v1928 = vsel %vm1731, %v1879, %v1682
        %v1929 = vsel %vm1732, %v1880, %v1683
        %v1930 = vsel %vm1733, %v1881, %v1684
        %v1931 = vsel %vm1734, %v1882, %v1685
        %v1932 = vsel %vm1735, %v1883, %v1686
        %v1933 = vsel %vm1736, %v1884, %v1687
        %v1934 = vsel %vm1737, %v1885, %v1688
        %v1935 = vsel %vm1738, %v1886, %v1689
        %v1936 = vsel %vm1739, %v1887, %v1690
        %v1937 = vsel %vm1740, %v1888, %v1691
        %v1938 = vsel %vm1741, %v1889, %v1692
        %v1939 = vsel %vm1742, %v1890, %v1693
        %v1940 = vsel %vm1743, %v1891, %v1694
        %v1941 = vsel %vm1744, %v1892, %v1695
        %v1942 = vsel %vm1745, %v1893, %v1696
        %v1943 = vsel %vm1746, %v1894, %v1697
        %v1944 = vsel %vm1747, %v1895, %v1698
        %v1945 = vsel %vm1748, %v1896, %v1699
        %v1946 = vsel %vm1749, %v1897, %v1700
        %v1947 = vsel %vm1750, %v1898, %v1701
        %v1948 = vsel %vm1751, %v1899, %v1702
        %v1949 = vsel %vm1752, %v1900, %v1703
        %vm1950 = vcmp.eq.s32.totalorder %v232, 7
        %vm1951 = vcmp.eq.s32.totalorder %v236, 7
        %vm1952 = vcmp.eq.s32.totalorder %v240, 7
        %vm1953 = vcmp.eq.s32.totalorder %v244, 7
        %vm1954 = vcmp.eq.s32.totalorder %v248, 7
        %vm1955 = vcmp.eq.s32.totalorder %v252, 7
        %vm1956 = vcmp.eq.s32.totalorder %v256, 7
        %vm1957 = vcmp.eq.s32.totalorder %v260, 7
        %vm1958 = vcmp.eq.s32.totalorder %v264, 7
        %vm1959 = vcmp.eq.s32.totalorder %v268, 7
        %vm1960 = vcmp.eq.s32.totalorder %v272, 7
        %vm1961 = vcmp.eq.s32.totalorder %v276, 7
        %vm1962 = vcmp.eq.s32.totalorder %v280, 7
        %vm1963 = vcmp.eq.s32.totalorder %v284, 7
        %vm1964 = vcmp.eq.s32.totalorder %v288, 7
        %vm1965 = vcmp.eq.s32.totalorder %v292, 7
        %vm1966 = vcmp.eq.s32.totalorder %v296, 7
        %vm1967 = vcmp.eq.s32.totalorder %v300, 7
        %vm1968 = vcmp.eq.s32.totalorder %v304, 7
        %vm1969 = vcmp.eq.s32.totalorder %v308, 7
        %vm1970 = vcmp.eq.s32.totalorder %v312, 7
        %vm1971 = vcmp.eq.s32.totalorder %v316, 7
        %vm1972 = vcmp.eq.s32.totalorder %v320, 7
        %vm1973 = vcmp.eq.s32.totalorder %v324, 7
        %vm1974 = vcmp.eq.s32.totalorder %v328, 7
        %vm1975 = vcmp.eq.s32.totalorder %v332, 7
        %vm1976 = vcmp.eq.s32.totalorder %v336, 7
        %vm1977 = vcmp.eq.s32.totalorder %v340, 7
        %vm1978 = vcmp.eq.s32.totalorder %v344, 7
        %vm1979 = vcmp.eq.s32.totalorder %v348, 7
        %vm1980 = vcmp.eq.s32.totalorder %v352, 7
        %vm1981 = vcmp.eq.s32.totalorder %v356, 7
        %vm1982 = vcmp.eq.s32.totalorder %v360, 7
        %vm1983 = vcmp.eq.s32.totalorder %v364, 7
        %vm1984 = vcmp.eq.s32.totalorder %v368, 7
        %vm1985 = vcmp.eq.s32.totalorder %v372, 7
        %vm1986 = vcmp.eq.s32.totalorder %v376, 7
        %vm1987 = vcmp.eq.s32.totalorder %v380, 7
        %vm1988 = vcmp.eq.s32.totalorder %v384, 7
        %vm1989 = vcmp.eq.s32.totalorder %v388, 7
        %vm1990 = vcmp.eq.s32.totalorder %v392, 7
        %vm1991 = vcmp.eq.s32.totalorder %v396, 7
        %vm1992 = vcmp.eq.s32.totalorder %v400, 7
        %vm1993 = vcmp.eq.s32.totalorder %v404, 7
        %vm1994 = vcmp.eq.s32.totalorder %v408, 7
        %vm1995 = vcmp.eq.s32.totalorder %v412, 7
        %vm1996 = vcmp.eq.s32.totalorder %v416, 7
        %vm1997 = vcmp.eq.s32.totalorder %v420, 7
        %vm1998 = vcmp.eq.s32.totalorder %v424, 7
        %v1999 = vrot.slane %v173, 1
        %v2000 = vrot.slane %v174, 1
        %v2001 = vrot.slane %v175, 1
        %v2002 = vrot.slane %v176, 1
        %v2003 = vrot.slane %v177, 1
        %v2004 = vrot.slane %v178, 1
        %v2005 = vrot.slane %v179, 1
        %v2006 = vrot.slane %v180, 1
        %v2007 = vrot.slane %v181, 1
        %v2008 = vrot.slane %v182, 1
        %v2009 = vrot.slane %v183, 1
        %v2010 = vrot.slane %v184, 1
        %v2011 = vrot.slane %v185, 1
        %v2012 = vrot.slane %v186, 1
        %v2013 = vrot.slane %v187, 1
        %v2014 = vrot.slane %v188, 1
        %v2015 = vrot.slane %v189, 1
        %v2016 = vrot.slane %v190, 1
        %v2017 = vrot.slane %v191, 1
        %v2018 = vrot.slane %v192, 1
        %v2019 = vrot.slane %v193, 1
        %v2020 = vrot.slane %v194, 1
        %v2021 = vrot.slane %v195, 1
        %v2022 = vrot.slane %v196, 1
        %v2023 = vrot.slane %v197, 1
        %v2024 = vrot.slane %v198, 1
        %v2025 = vrot.slane %v199, 1
        %v2026 = vrot.slane %v200, 1
        %v2027 = vrot.slane %v201, 1
        %v2028 = vrot.slane %v202, 1
        %v2029 = vrot.slane %v203, 1
        %v2030 = vrot.slane %v204, 1
        %v2031 = vrot.slane %v205, 1
        %v2032 = vrot.slane %v206, 1
        %v2033 = vrot.slane %v207, 1
        %v2034 = vrot.slane %v208, 1
        %v2035 = vrot.slane %v209, 1
        %v2036 = vrot.slane %v210, 1
        %v2037 = vrot.slane %v211, 1
        %v2038 = vrot.slane %v212, 1
        %v2039 = vrot.slane %v213, 1
        %v2040 = vrot.slane %v214, 1
        %v2041 = vrot.slane %v215, 1
        %v2042 = vrot.slane %v216, 1
        %v2043 = vrot.slane %v217, 1
        %v2044 = vrot.slane %v218, 1
        %v2045 = vrot.slane %v219, 1
        %v2046 = vrot.slane %v220, 1
        %v2047 = vrot.slane %v221, 1
        %vm2097 = vcmask 1046528
        %v2098 = vsel %vm2097, %v1999, %v1999
        %v2099 = vsel %vm2097, %v2000, %v2000
        %v2100 = vsel %vm2097, %v2001, %v2001
        %v2101 = vsel %vm2097, %v2002, %v2002
        %v2102 = vsel %vm2097, %v2003, %v2003
        %v2103 = vsel %vm2097, %v2004, %v2004
        %v2104 = vsel %vm2097, %v2005, %v2005
        %v2105 = vsel %vm2097, %v2006, %v2006
        %v2106 = vsel %vm2097, %v2007, %v2007
        %v2107 = vsel %vm2097, %v2008, %v2008
        %v2108 = vsel %vm2097, %v2009, %v2009
        %v2109 = vsel %vm2097, %v2010, %v2010
        %v2110 = vsel %vm2097, %v2011, %v2011
        %v2111 = vsel %vm2097, %v2012, %v2012
        %v2112 = vsel %vm2097, %v2013, %v2013
        %v2113 = vsel %vm2097, %v2014, %v2014
        %v2114 = vsel %vm2097, %v2015, %v2015
        %v2115 = vsel %vm2097, %v2016, %v2016
        %v2116 = vsel %vm2097, %v2017, %v2017
        %v2117 = vsel %vm2097, %v2018, %v2018
        %v2118 = vsel %vm2097, %v2019, %v2019
        %v2119 = vsel %vm2097, %v2020, %v2020
        %v2120 = vsel %vm2097, %v2021, %v2021
        %v2121 = vsel %vm2097, %v2022, %v2022
        %v2122 = vsel %vm2097, %v2023, %v2023
        %v2123 = vsel %vm2097, %v2024, %v2024
        %v2124 = vsel %vm2097, %v2025, %v2025
        %v2125 = vsel %vm2097, %v2026, %v2026
        %v2126 = vsel %vm2097, %v2027, %v2027
        %v2127 = vsel %vm2097, %v2028, %v2028
        %v2128 = vsel %vm2097, %v2029, %v2029
        %v2129 = vsel %vm2097, %v2030, %v2030
        %v2130 = vsel %vm2097, %v2031, %v2031
        %v2131 = vsel %vm2097, %v2032, %v2032
        %v2132 = vsel %vm2097, %v2033, %v2033
        %v2133 = vsel %vm2097, %v2034, %v2034
        %v2134 = vsel %vm2097, %v2035, %v2035
        %v2135 = vsel %vm2097, %v2036, %v2036
        %v2136 = vsel %vm2097, %v2037, %v2037
        %v2137 = vsel %vm2097, %v2038, %v2038
        %v2138 = vsel %vm2097, %v2039, %v2039
        %v2139 = vsel %vm2097, %v2040, %v2040
        %v2140 = vsel %vm2097, %v2041, %v2041
        %v2141 = vsel %vm2097, %v2042, %v2042
        %v2142 = vsel %vm2097, %v2043, %v2043
        %v2143 = vsel %vm2097, %v2044, %v2044
        %v2144 = vsel %vm2097, %v2045, %v2045
        %v2145 = vsel %vm2097, %v2046, %v2046
        %v2146 = vsel %vm2097, %v2047, %v2047
        %v2147 = vsel %vm1950, %v2098, %v1901
        %v2148 = vsel %vm1951, %v2099, %v1902
        %v2149 = vsel %vm1952, %v2100, %v1903
        %v2150 = vsel %vm1953, %v2101, %v1904
        %v2151 = vsel %vm1954, %v2102, %v1905
        %v2152 = vsel %vm1955, %v2103, %v1906
        %v2153 = vsel %vm1956, %v2104, %v1907
        %v2154 = vsel %vm1957, %v2105, %v1908
        %v2155 = vsel %vm1958, %v2106, %v1909
        %v2156 = vsel %vm1959, %v2107, %v1910
        %v2157 = vsel %vm1960, %v2108, %v1911
        %v2158 = vsel %vm1961, %v2109, %v1912
        %v2159 = vsel %vm1962, %v2110, %v1913
        %v2160 = vsel %vm1963, %v2111, %v1914
        %v2161 = vsel %vm1964, %v2112, %v1915
        %v2162 = vsel %vm1965, %v2113, %v1916
        %v2163 = vsel %vm1966, %v2114, %v1917
        %v2164 = vsel %vm1967, %v2115, %v1918
        %v2165 = vsel %vm1968, %v2116, %v1919
        %v2166 = vsel %vm1969, %v2117, %v1920
        %v2167 = vsel %vm1970, %v2118, %v1921
        %v2168 = vsel %vm1971, %v2119, %v1922
        %v2169 = vsel %vm1972, %v2120, %v1923
        %v2170 = vsel %vm1973, %v2121, %v1924
        %v2171 = vsel %vm1974, %v2122, %v1925
        %v2172 = vsel %vm1975, %v2123, %v1926
        %v2173 = vsel %vm1976, %v2124, %v1927
        %v2174 = vsel %vm1977, %v2125, %v1928
        %v2175 = vsel %vm1978, %v2126, %v1929
        %v2176 = vsel %vm1979, %v2127, %v1930
        %v2177 = vsel %vm1980, %v2128, %v1931
        %v2178 = vsel %vm1981, %v2129, %v1932
        %v2179 = vsel %vm1982, %v2130, %v1933
        %v2180 = vsel %vm1983, %v2131, %v1934
        %v2181 = vsel %vm1984, %v2132, %v1935
        %v2182 = vsel %vm1985, %v2133, %v1936
        %v2183 = vsel %vm1986, %v2134, %v1937
        %v2184 = vsel %vm1987, %v2135, %v1938
        %v2185 = vsel %vm1988, %v2136, %v1939
        %v2186 = vsel %vm1989, %v2137, %v1940
        %v2187 = vsel %vm1990, %v2138, %v1941
        %v2188 = vsel %vm1991, %v2139, %v1942
        %v2189 = vsel %vm1992, %v2140, %v1943
        %v2190 = vsel %vm1993, %v2141, %v1944
        %v2191 = vsel %vm1994, %v2142, %v1945
        %v2192 = vsel %vm1995, %v2143, %v1946
        %v2193 = vsel %vm1996, %v2144, %v1947
        %v2194 = vsel %vm1997, %v2145, %v1948
        %v2195 = vsel %vm1998, %v2146, %v1949
        %2196 = vst [vmem:[%s172] sm:$0xff] %v2147
        %2197 = vst [vmem:[%s172 + $0x8] sm:$0xff] %v2148
        %2198 = vst [vmem:[%s172 + $0x10] sm:$0xff] %v2149
        %2199 = vst [vmem:[%s172 + $0x18] sm:$0xff] %v2150
        %2200 = vst [vmem:[%s172 + $0x20] sm:$0xff] %v2151
        %2201 = vst [vmem:[%s172 + $0x28] sm:$0xff] %v2152
        %2202 = vst [vmem:[%s172 + $0x30] sm:$0xff] %v2153
        %2203 = vst [vmem:[%s172 + $0x38] sm:$0xff] %v2154
        %2204 = vst [vmem:[%s172 + $0x40] sm:$0xff] %v2155
        %2205 = vst [vmem:[%s172 + $0x48] sm:$0xff] %v2156
        %2206 = vst [vmem:[%s172 + $0x50] sm:$0xff] %v2157
        %2207 = vst [vmem:[%s172 + $0x58] sm:$0xff] %v2158
        %2208 = vst [vmem:[%s172 + $0x60] sm:$0xff] %v2159
        %2209 = vst [vmem:[%s172 + $0x68] sm:$0xff] %v2160
        %2210 = vst [vmem:[%s172 + $0x70] sm:$0xff] %v2161
        %2211 = vst [vmem:[%s172 + $0x78] sm:$0xff] %v2162
        %2212 = vst [vmem:[%s172 + $0x80] sm:$0xff] %v2163
        %2213 = vst [vmem:[%s172 + $0x88] sm:$0xff] %v2164
        %2214 = vst [vmem:[%s172 + $0x90] sm:$0xff] %v2165
        %2215 = vst [vmem:[%s172 + $0x98] sm:$0xff] %v2166
        %2216 = vst [vmem:[%s172 + $0xa0] sm:$0xff] %v2167
        %2217 = vst [vmem:[%s172 + $0xa8] sm:$0xff] %v2168
        %2218 = vst [vmem:[%s172 + $0xb0] sm:$0xff] %v2169
        %2219 = vst [vmem:[%s172 + $0xb8] sm:$0xff] %v2170
        %2220 = vst [vmem:[%s172 + $0xc0] sm:$0xff] %v2171
        %2221 = vst [vmem:[%s172 + $0xc8] sm:$0xff] %v2172
        %2222 = vst [vmem:[%s172 + $0xd0] sm:$0xff] %v2173
        %2223 = vst [vmem:[%s172 + $0xd8] sm:$0xff] %v2174
        %2224 = vst [vmem:[%s172 + $0xe0] sm:$0xff] %v2175
        %2225 = vst [vmem:[%s172 + $0xe8] sm:$0xff] %v2176
        %2226 = vst [vmem:[%s172 + $0xf0] sm:$0xff] %v2177
        %2227 = vst [vmem:[%s172 + $0xf8] sm:$0xff] %v2178
        %2228 = vst [vmem:[%s172 + $0x100] sm:$0xff] %v2179
        %2229 = vst [vmem:[%s172 + $0x108] sm:$0xff] %v2180
        %2230 = vst [vmem:[%s172 + $0x110] sm:$0xff] %v2181
        %2231 = vst [vmem:[%s172 + $0x118] sm:$0xff] %v2182
        %2232 = vst [vmem:[%s172 + $0x120] sm:$0xff] %v2183
        %2233 = vst [vmem:[%s172 + $0x128] sm:$0xff] %v2184
        %2234 = vst [vmem:[%s172 + $0x130] sm:$0xff] %v2185
        %2235 = vst [vmem:[%s172 + $0x138] sm:$0xff] %v2186
        %2236 = vst [vmem:[%s172 + $0x140] sm:$0xff] %v2187
        %2237 = vst [vmem:[%s172 + $0x148] sm:$0xff] %v2188
        %2238 = vst [vmem:[%s172 + $0x150] sm:$0xff] %v2189
        %2239 = vst [vmem:[%s172 + $0x158] sm:$0xff] %v2190
        %2240 = vst [vmem:[%s172 + $0x160] sm:$0xff] %v2191
        %2241 = vst [vmem:[%s172 + $0x168] sm:$0xff] %v2192
        %2242 = vst [vmem:[%s172 + $0x170] sm:$0xff] %v2193
        %2243 = vst [vmem:[%s172 + $0x178] sm:$0xff] %v2194
        %2244 = vst [vmem:[%s172 + $0x180] sm:$0xff] %v2195
        %s2245 = sand.u32 %s75, 1
        %s2246 = scalar_lea.sflag [#allocation4], %s2245
        %s2247 = sand.u32 %s75, 1
        %s2248 = smul.addr %s2247, 392
        %s2249 = scalar_lea.vmem [#allocation7], %s2248
        // Predicated region
        $region37: #{tpu_custom_call.1} parent=27 // pred_check
          %p2250 = pneg %p85
        $region38: #{tpu_custom_call.1} parent=27 // pred_check_branch
          %2252 = sbr.rel (%p2250) target = $region40
        $region39: #{tpu_custom_call.1} parent=27 // pred_region
          %s2254 = ssub.s32 6272, 6272
          %2255 = vsyncadd %s2246, %s2254
          %s2256 = smul.addr %s20, 49
          %s2257 = smul.addr %s2256, 128
          %s2258 = scalar_lea.hbm %s2, %s2257
          %s2260 = sshll.u32 %s2249, 4
          %s2261 = int_to_ptr.vmem [resolvable:$true] %s2260
          %2263 = dma.vmem_to_hbm [thread:$0]  %s2261, 6272, %s2258, %s2246
        $region40: #{tpu_custom_call.1} parent=27 // pred_fallthru
          _
      $region28: #{tpu_custom_call.1} parent=5 // pred_fallthru
        _
      %p2264 = scmp.le.s32.totalorder 2, %s15
      // Predicated region
      $region41: #{tpu_custom_call.1} parent=5 // pred_check
        %p2265 = pneg %p2264
      $region42: #{tpu_custom_call.1} parent=5 // pred_check_branch
        %2267 = sbr.rel (%p2265) target = $region44
      $region43: #{tpu_custom_call.1} parent=5 // pred_region
        %s2268 = ssub.s32 %s15, 2
        // Predicated region
        $region45: #{tpu_custom_call.1} parent=43 // pred_check
          %p2269 = pneg %p91
        $region46: #{tpu_custom_call.1} parent=43 // pred_check_branch
          %2271 = sbr.rel (%p2269) target = $region48
        $region47: #{tpu_custom_call.1} parent=43 // pred_region
          %s2272 = sand.u32 %s76, 1
          %s2273 = scalar_lea.sflag [#allocation4], %s2272
          %s2274 = sand.u32 %s76, 1
          %s2275 = smul.addr %s2274, 392
          %s2276 = scalar_lea.vmem [#allocation7], %s2275
          %2277 = dma.done %s2273, 6272
        $region48: #{tpu_custom_call.1} parent=43 // pred_fallthru
          _
      $region44: #{tpu_custom_call.1} parent=5 // pred_fallthru
        _
    $region6: #{tpu_custom_call.1} parent=1 // loop_footer
      %s19 = sadd.s32 1, %s15
    $region7: #{tpu_custom_call.1} parent=1 // loop_footer_branch
      %14 = sbr.rel target = $region3
    $region8: #{tpu_custom_call.1} parent=1 // loop_exit
      _
    %2278 = vsyncpa [#allocation3], 1
    %s2279 = scalar_lea.sflag [#allocation3], 1
    %2280 = vsyncpa %s2279, 1
    %2281 = vsyncpa [#allocation6], 1
    %s2282 = scalar_lea.sflag [#allocation6], 1
    %2283 = vsyncpa %s2282, 1
    %2284 = vsyncpa [#allocation4], 1
    %s2285 = scalar_lea.sflag [#allocation4], 1
    %2286 = vsyncpa %s2285, 1

</llo_original>
